<compile_context>
chip_gen: v6e
topology: v6e:2x2x1
jax: 0.10.0
libtpu: 0.0.40
codegen_flags: <defaults>
</compile_context>

<pallas_src>
import math
import functools

import jax
import jax.numpy as jnp
from jax.experimental import pallas as pl
from jax.experimental.pallas import tpu as pltpu


INV_SQRT_2PI = 1.0 / math.sqrt(2.0 * math.pi)


def lambda_init_fn(depth):
    return 0.8 - 0.6 * math.exp(-0.3 * depth)


# ---------------------------------------------------------------------------
# Pallas kernel: one (batch, head-pair-group, query-tile) block per grid step.
# ---------------------------------------------------------------------------
def _diff_attn_kernel(lam_ref, q_ref, k_ref, v_ref, sig_ref, gamma_ref,
                      vout_ref, series_ref, prior_ref, sigma_ref,
                      *, lambda_init, rms_eps, approx_recip):
    _, two_g, Tq, Dh = q_ref.shape
    G = two_g // 2
    L = k_ref.shape[2]

    def recip(x):
        return pl.reciprocal(x, approx=True) if approx_recip else 1.0 / x

    lam = lam_ref[0]                                   # scalar lambda_full (SMEM)

    # ---- fused QK^T: both heads of each pair in one MXU call (M = 2*Tq) ----
    # `scaling` is already folded into wq in the wrapper; q/k may be bf16,
    # accumulation is f32.
    qs = q_ref[0].reshape(G, 2 * Tq, Dh)               # (G, 2Tq, Dh)
    k = k_ref[0]                                       # (G, L, Dh)
    s = jnp.einsum('gqd,gkd->gqk', qs, k,
                   preferred_element_type=jnp.float32)  # (G, 2Tq, L) f32

    # ---- first softmax per head (row-max, exp, sum, reciprocal) ----
    m = jnp.max(s, axis=-1, keepdims=True)
    e = jnp.exp(s - m)
    r = recip(jnp.sum(e, axis=-1, keepdims=True))      # (G, 2Tq, 1)
    e = e.reshape(G, 2, Tq, L)
    r = r.reshape(G, 2, Tq, 1)

    # differential attention weights: sm0 - lambda * sm1 (no `a` materialized)
    aw = e[:, 0] * r[:, 0] - e[:, 1] * (lam * r[:, 1])  # (G, Tq, L) f32

    # ---- series = softmax(aw); aw in [-lambda, 1] so no max-shift needed ----
    # (dropout p = 0 == identity)
    es = jnp.exp(aw)
    series_ref[0] = (es * recip(jnp.sum(es, axis=-1, keepdims=True))
                     ).astype(series_ref.dtype)

    # ---- sigma transform + gaussian prior (distances via in-kernel iota) ----
    # emitted before the AV matmul so score-sized temporaries die early.
    sp = jax.nn.sigmoid(sig_ref[0] * 5.0) + 1e-5        # (G, Tq, 1) f32
    sp = jnp.power(3.0, sp) - 1.0
    sigma_ref[0] = sp

    qt = pl.program_id(2)
    row = jax.lax.broadcasted_iota(jnp.int32, (Tq, L), 0) + qt * Tq
    col = jax.lax.broadcasted_iota(jnp.int32, (Tq, L), 1)
    d = jnp.abs(row - col).astype(jnp.float32)
    neg_half_d2 = d * d * (-0.5)                        # (Tq, L)

    inv_s = recip(sp)                                   # (G, Tq, 1)
    prior_ref[0] = ((INV_SQRT_2PI * inv_s)
                    * jnp.exp(neg_half_d2[None] * (inv_s * inv_s))
                    ).astype(prior_ref.dtype)

    # ---- attn @ V (pairs 2m, 2m+1 share one kv head) + RMSNorm ----
    v = v_ref[0]                                        # (max(G//2,1), L, 2Dh)
    awm = aw.reshape(G // 2, 2 * Tq, L) if G > 1 else aw
    awm = awm.astype(v.dtype)
    o = jnp.einsum('gql,gld->gqd', awm, v,
                   preferred_element_type=jnp.float32)
    o = o.reshape(G, Tq, 2 * Dh)

    msq = jnp.mean(o * o, axis=-1, keepdims=True)
    normed = o * jax.lax.rsqrt(msq + rms_eps) * gamma_ref[...]   # (G,Tq,2Dh)
    normed = normed * (1.0 - lambda_init)

    # one lane-dense store: (Tq, 2*G*Dh) slab, head-major feature order
    if G > 1:
        slab = jnp.concatenate([normed[g] for g in range(G)], axis=-1)
    else:
        slab = normed[0]
    vout_ref[0] = slab.astype(vout_ref.dtype)


# ---------------------------------------------------------------------------
# Tiling heuristics.
# ---------------------------------------------------------------------------
def _pick_head_group(H, Dh, d_model):
    """Smallest group of head pairs whose fused output width is block-legal /
    lane-dense (2*G*Dh == d_model or a multiple of 128)."""
    cands = [1] + [g for g in range(2, H + 1, 2) if H % g == 0]
    for g in cands:
        w = 2 * g * Dh
        if w == d_model or w % 128 == 0:
            return g
    return H


def _estimate_vmem_bytes(Tq, L, G, Dh, in_bytes, out_bytes, kv_buffers):
    Gv = max(G // 2, 1)
    b = 0
    b += 2 * (2 * G * Tq * Dh) * in_bytes              # q (double-buffered)
    b += kv_buffers * (G * L * Dh) * in_bytes          # k (resident along t)
    b += kv_buffers * (Gv * L * 2 * Dh) * in_bytes     # v (resident along t)
    b += 2 * (G * Tq) * 4                              # sigma in
    b += 2 * (Tq * 2 * G * Dh) * 4                     # vout
    b += 2 * 2 * (G * Tq * L) * out_bytes              # series + prior
    b += 2 * (G * Tq) * 4                              # sigma out
    scratch = 6 * (G * Tq * L) * 4                     # live f32 score-sized temps
    return b + scratch


def _pick_tq(L, G, Dh, budget_bytes, in_bytes, out_bytes, kv_buffers):
    cands = []
    if L <= 512:
        cands.append(L)
    for t in (512, 256, 128, 64, 32, 16, 8):
        if t < L and L % t == 0:
            cands.append(t)
    if not cands:
        return L
    for t in cands:                                    # largest-first
        if _estimate_vmem_bytes(t, L, G, Dh, in_bytes, out_bytes,
                                kv_buffers) <= budget_bytes:
            return t
    return min(cands)                                  # smallest available tile


def _kv_block_spec(shape, index_map, single_buffer):
    """K/V blocks are constant along the query-tile axis; on small-VMEM parts
    (v7x) request single buffering to free ~2x their VMEM footprint."""
    if single_buffer:
        try:
            return pl.BlockSpec(shape, index_map, pipeline_mode=pl.Buffered(1))
        except TypeError:
            pass
    return pl.BlockSpec(shape, index_map)


# ---------------------------------------------------------------------------
# Wrapper: projections in plain JAX, attention core in the Pallas kernel.
# ---------------------------------------------------------------------------
def differential_attention_forward(x, params, *, n_heads, depth, window_size,
                                   approx_recip=False,
                                   compute_dtype=jnp.bfloat16,
                                   attn_out_dtype=jnp.bfloat16,
                                   vmem_budget_bytes=None):
    B, L, d_model = x.shape
    H = n_heads
    assert H % 2 == 0, "n_heads must be even (num_kv_heads = n_heads // 2)"
    Dh = d_model // n_heads // 2
    assert 2 * H * Dh == d_model
    scaling = Dh ** (-0.5)
    lambda_init = lambda_init_fn(depth)
    assert window_size == L, "prior/sigma math requires window_size == length"

    # generation-aware VMEM budgeting (v7x has 64 MiB per TC vs 128 MiB)
    try:
        vmem_cap = pltpu.get_tpu_info().vmem_capacity_bytes
    except Exception:
        vmem_cap = 128 * 2 ** 20
    small_vmem = vmem_cap < 100 * 2 ** 20
    vmem_limit = (40 if small_vmem else 48) * 2 ** 20
    if vmem_budget_bytes is None:
        vmem_budget_bytes = (13 if small_vmem else 26) * 2 ** 20

    # projections (glue); scaling folded into wq once
    q = x @ (params["wq"] * scaling)              # (B, L, d_model)
    k = x @ params["wk"]                          # (B, L, d_model // 2)
    v = x @ params["wv"]                          # (B, L, d_model // 2)
    sig = x @ params["wsig"] + params["bsig"]     # (B, L, H)

    # head split; repeat_kv(interleave) is realized via index_maps / in-kernel
    # pairing.  q/k/v are cast to compute_dtype (bf16) so DMA'd blocks are
    # half-size and the MXU runs at bf16 rate (f32 accumulation in-kernel).
    q = q.reshape(B, L, 2 * H, Dh).transpose(0, 2, 1, 3).astype(compute_dtype)
    k = k.reshape(B, L, H, Dh).transpose(0, 2, 1, 3).astype(compute_dtype)
    v = v.reshape(B, L, H // 2, 2 * Dh).transpose(0, 2, 1, 3).astype(compute_dtype)
    sig = sig.transpose(0, 2, 1)[..., None]                      # (B, H, L, 1) f32

    lam1 = jnp.exp(jnp.sum(params["lambda_q1"] * params["lambda_k1"]))
    lam2 = jnp.exp(jnp.sum(params["lambda_q2"] * params["lambda_k2"]))
    lambda_full = (lam1 - lam2 + lambda_init).reshape(1).astype(jnp.float32)

    gamma = params["rms_weight"].reshape(1, 2 * Dh).astype(jnp.float32)

    in_bytes = jnp.dtype(compute_dtype).itemsize
    out_bytes = jnp.dtype(attn_out_dtype).itemsize
    kv_buffers = 1 if small_vmem else 2

    G = _pick_head_group(H, Dh, d_model)          # head pairs per grid step
    Tq = _pick_tq(L, G, Dh, vmem_budget_bytes, in_bytes, out_bytes, kv_buffers)
    n_qt = L // Tq
    Gv = max(G // 2, 1)

    if G > 1:
        v_index = lambda b, g, t: (b, g, 0, 0)
    else:
        v_index = lambda b, g, t: (b, g // 2, 0, 0)

    kernel = functools.partial(
        _diff_attn_kernel, lambda_init=lambda_init, rms_eps=1e-5,
        approx_recip=approx_recip)

    vout, series, prior, sigma_small = pl.pallas_call(
        kernel,
        grid=(B, H // G, n_qt),
        in_specs=[
            pl.BlockSpec(memory_space=pltpu.SMEM),                           # lambda_full
            pl.BlockSpec((1, 2 * G, Tq, Dh), lambda b, g, t: (b, g, t, 0)),  # q head group
            _kv_block_spec((1, G, L, Dh), lambda b, g, t: (b, g, 0, 0),
                           small_vmem),                                      # k heads
            _kv_block_spec((1, Gv, L, 2 * Dh), v_index, small_vmem),         # v kv heads
            pl.BlockSpec((1, G, Tq, 1), lambda b, g, t: (b, g, t, 0)),       # sigma raw
            pl.BlockSpec((1, 2 * Dh), lambda b, g, t: (0, 0)),               # RMSNorm gamma
        ],
        out_specs=[
            pl.BlockSpec((1, Tq, 2 * G * Dh), lambda b, g, t: (b, t, g)),    # V slab
            pl.BlockSpec((1, G, Tq, L), lambda b, g, t: (b, g, t, 0)),       # series
            pl.BlockSpec((1, G, Tq, L), lambda b, g, t: (b, g, t, 0)),       # prior
            pl.BlockSpec((1, G, Tq, 1), lambda b, g, t: (b, g, t, 0)),       # sigma rows
        ],
        out_shape=[
            jax.ShapeDtypeStruct((B, L, d_model), jnp.float32),
            jax.ShapeDtypeStruct((B, H, L, L), attn_out_dtype),
            jax.ShapeDtypeStruct((B, H, L, L), attn_out_dtype),
            jax.ShapeDtypeStruct((B, H, L, 1), jnp.float32),
        ],
        compiler_params=pltpu.CompilerParams(
            dimension_semantics=("parallel", "parallel", "arbitrary"),
            vmem_limit_bytes=vmem_limit),
    )(lambda_full, q, k, v, sig, gamma)

    # output projection directly on the lane-dense slab (no transpose round-trip)
    out = vout @ params["wout"]
    # sigma is a row-broadcast; expand outside the kernel (saves 1/3 of writeback)
    sigma = jnp.broadcast_to(sigma_small, (B, H, L, window_size))
    # TODO(synk): causal-mask path (`if attn_mask:` truthy) not implemented;
    # this matches the reference when attn_mask=None (falsy -> no masking).
    return out, series, prior, sigma


# ---------------------------------------------------------------------------
# Pure-JAX reference mirroring the PyTorch forward (for validation).
# ---------------------------------------------------------------------------
def reference_forward(x, params, *, n_heads, depth, window_size):
    B, L, d_model = x.shape
    H = n_heads
    Dh = d_model // n_heads // 2
    scaling = Dh ** (-0.5)
    lambda_init = lambda_init_fn(depth)

    q = x @ params["wq"]
    k = x @ params["wk"]
    v = x @ params["wv"]
    sig = x @ params["wsig"] + params["bsig"]

    q = q.reshape(B, L, 2 * H, Dh).transpose(0, 2, 1, 3)
    k = jnp.repeat(k.reshape(B, L, H, Dh).transpose(0, 2, 1, 3), 2, axis=1)
    v = jnp.repeat(v.reshape(B, L, H // 2, 2 * Dh).transpose(0, 2, 1, 3), 2, axis=1)

    scores = jnp.einsum("bhld,bhmd->bhlm", q, k)
    aw = jax.nn.softmax(scaling * scores, axis=-1)

    lam1 = jnp.exp(jnp.sum(params["lambda_q1"] * params["lambda_k1"]))
    lam2 = jnp.exp(jnp.sum(params["lambda_q2"] * params["lambda_k2"]))
    lam = lam1 - lam2 + lambda_init

    aw = aw.reshape(B, H, 2, L, L)
    aw = aw[:, :, 0] - lam * aw[:, :, 1]

    sig = sig.transpose(0, 2, 1)
    sig = jax.nn.sigmoid(sig * 5.0) + 1e-5
    sig = jnp.power(3.0, sig) - 1.0
    sig = jnp.repeat(sig[..., None], window_size, axis=-1)

    idx = jnp.arange(window_size)
    dist = jnp.abs(idx[:, None] - idx[None, :]).astype(jnp.float32)
    prior = (1.0 / (math.sqrt(2.0 * math.pi) * sig)) * jnp.exp(
        -(dist[None, None] ** 2) / 2.0 / (sig ** 2))

    series = jax.nn.softmax(aw, axis=-1)

    o = jnp.einsum("bhlm,bhmd->bhld", aw, v)
    ms = jnp.mean(o * o, axis=-1, keepdims=True)
    V = o * jax.lax.rsqrt(ms + 1e-5) * params["rms_weight"]
    V = V * (1.0 - lambda_init)

    out = V.transpose(0, 2, 1, 3).reshape(B, L, d_model) @ params["wout"]
    return out, series, prior, sig


def init_params(key, d_model, n_heads):
    Dh = d_model // n_heads // 2
    ks = jax.random.split(key, 9)
    s = 0.05
    return dict(
        wq=jax.random.normal(ks[0], (d_model, d_model), jnp.float32) * s,
        wk=jax.random.normal(ks[1], (d_model, d_model // 2), jnp.float32) * s,
        wv=jax.random.normal(ks[2], (d_model, d_model // 2), jnp.float32) * s,
        wout=jax.random.normal(ks[3], (d_model, d_model), jnp.float32) * s,
        wsig=jax.random.normal(ks[4], (d_model, n_heads), jnp.float32) * s,
        bsig=jnp.zeros((n_heads,), jnp.float32),
        lambda_q1=jax.random.normal(ks[5], (Dh,), jnp.float32) * 0.1,
        lambda_k1=jax.random.normal(ks[6], (Dh,), jnp.float32) * 0.1,
        lambda_q2=jax.random.normal(ks[7], (Dh,), jnp.float32) * 0.1,
        lambda_k2=jax.random.normal(ks[8], (Dh,), jnp.float32) * 0.1,
        rms_weight=jnp.ones((2 * Dh,), jnp.float32),
    )


if __name__ == "__main__":
    B, L, d_model, n_heads, depth = 2, 8, 64, 4, 1
    window_size = L

    key = jax.random.PRNGKey(0)
    k_param, k_x = jax.random.split(key)
    params = init_params(k_param, d_model, n_heads)
    x = jax.random.normal(k_x, (B, L, d_model), jnp.float32)

    out, series, prior, sigma = differential_attention_forward(
        x, params, n_heads=n_heads, depth=depth, window_size=window_size)
    jax.block_until_ready((out, series, prior, sigma))

    ref_out, ref_series, ref_prior, ref_sigma = reference_forward(
        x, params, n_heads=n_heads, depth=depth, window_size=window_size)

    assert out.shape == (B, L, d_model)
    assert series.shape == (B, n_heads, L, L)
    assert prior.shape == (B, n_heads, L, window_size)
    assert sigma.shape == (B, n_heads, L, window_size)

    # bf16 at the HBM boundary (q/k/v inputs + series/prior stores) -> bf16-level
    # tolerances for those outputs; sigma stays on an f32 path (strict check).
    checks = [
        (out, ref_out, "out", 2e-2, 2e-2),
        (series, ref_series, "series", 2e-2, 2e-2),
        (prior, ref_prior, "prior", 2e-2, 2e-2),
        (sigma, ref_sigma, "sigma", 2e-5, 2e-5),
    ]
    for got, want, name, atol, rtol in checks:
        if not jnp.allclose(got.astype(jnp.float32), want, atol=atol, rtol=rtol):
            raise AssertionError(f"mismatch in {name}")

    print("KERNEL_OK")
</pallas_src>

<mosaic_0001>
module attributes {stable_mosaic.version = 11 : i64} {
  func.func @_diff_attn_kernel(%arg0: i32, %arg1: i32, %arg2: i32, %arg3: memref<1xf32, #tpu.memory_space<smem>>, %arg4: memref<1x8x8x8xbf16, #tpu.memory_space<vmem>>, %arg5: memref<1x4x8x8xbf16, #tpu.memory_space<vmem>>, %arg6: memref<1x2x8x16xbf16, #tpu.memory_space<vmem>>, %arg7: memref<1x4x8x1xf32, #tpu.memory_space<vmem>>, %arg8: memref<1x16xf32, #tpu.memory_space<vmem>>, %arg9: memref<1x8x64xf32, #tpu.memory_space<vmem>>, %arg10: memref<1x4x8x8xbf16, #tpu.memory_space<vmem>>, %arg11: memref<1x4x8x8xbf16, #tpu.memory_space<vmem>>, %arg12: memref<1x4x8x1xf32, #tpu.memory_space<vmem>>) attributes {dimension_semantics = [#tpu.dimension_semantics<parallel>, #tpu.dimension_semantics<parallel>, #tpu.dimension_semantics<arbitrary>], iteration_bounds = array<i64: 2, 1, 1>, scalar_prefetch = 0 : i64, scratch_operands = 0 : i64, tpu.core_type = #tpu.core_type<tc>, window_params = [{transform_indices = @transform_0, window_bounds = array<i64: 1>}, {transform_indices = @transform_1, window_bounds = array<i64: 1, 8, 8, 8>}, {transform_indices = @transform_2, window_bounds = array<i64: 1, 4, 8, 8>}, {transform_indices = @transform_3, window_bounds = array<i64: 1, 2, 8, 16>}, {transform_indices = @transform_4, window_bounds = array<i64: 1, 4, 8, 1>}, {pipeline_mode = #tpu.pipeline_mode<synchronous>, transform_indices = @transform_5, window_bounds = array<i64: 1, 16>}, {transform_indices = @transform_6, window_bounds = array<i64: 1, 8, 64>}, {transform_indices = @transform_7, window_bounds = array<i64: 1, 4, 8, 8>}, {transform_indices = @transform_8, window_bounds = array<i64: 1, 4, 8, 8>}, {transform_indices = @transform_9, window_bounds = array<i64: 1, 4, 8, 1>}]} {
    %c0 = arith.constant 0 : index
    %0 = memref.load %arg3[%c0] : memref<1xf32, #tpu.memory_space<smem>>
    %c0_0 = arith.constant 0 : index
    %c0_1 = arith.constant 0 : index
    %c0_2 = arith.constant 0 : index
    %c0_3 = arith.constant 0 : index
    %1 = vector.load %arg4[%c0_0, %c0_1, %c0_2, %c0_3] : memref<1x8x8x8xbf16, #tpu.memory_space<vmem>>, vector<1x8x8x8xbf16>
    %2 = vector.shape_cast %1 : vector<1x8x8x8xbf16> to vector<8x8x8xbf16>
    %3 = vector.shape_cast %2 : vector<8x8x8xbf16> to vector<4x16x8xbf16>
    %c0_4 = arith.constant 0 : index
    %c0_5 = arith.constant 0 : index
    %c0_6 = arith.constant 0 : index
    %c0_7 = arith.constant 0 : index
    %4 = vector.load %arg5[%c0_4, %c0_5, %c0_6, %c0_7] : memref<1x4x8x8xbf16, #tpu.memory_space<vmem>>, vector<1x4x8x8xbf16>
    %5 = vector.shape_cast %4 : vector<1x4x8x8xbf16> to vector<4x8x8xbf16>
    "tpu.trace_start"() <{level = 10 : i32, message = "gqd,gkd->gqk"}> : () -> ()
    %cst = arith.constant dense<0.000000e+00> : vector<4x16x8xf32>
    %6 = tpu.matmul %3, %5, %cst {dimension_numbers = #tpu.dot_dimension_numbers<[2], [2], [1], [1], [0, 0, 0, 1, 1, 1], [0], [0]>} : vector<4x16x8xbf16>, vector<4x8x8xbf16>, vector<4x16x8xf32> -> vector<4x16x8xf32>
    "tpu.trace_stop"() : () -> ()
    %cst_8 = arith.constant dense<0xFF800000> : vector<4x16xf32>
    %7 = vector.multi_reduction <maximumf>, %6, %cst_8 [2] : vector<4x16x8xf32> to vector<4x16xf32>
    %8 = vector.shape_cast %7 : vector<4x16xf32> to vector<4x16x1xf32>
    %9 = vector.broadcast %8 : vector<4x16x1xf32> to vector<4x16x8xf32>
    %10 = arith.subf %6, %9 : vector<4x16x8xf32>
    %11 = math.exp %10 : vector<4x16x8xf32>
    %cst_9 = arith.constant dense<0.000000e+00> : vector<4x16xf32>
    %12 = vector.multi_reduction <add>, %11, %cst_9 [2] : vector<4x16x8xf32> to vector<4x16xf32>
    %13 = vector.shape_cast %12 : vector<4x16xf32> to vector<4x16x1xf32>
    %cst_10 = arith.constant 1.000000e+00 : f32
    %14 = vector.broadcast %cst_10 : f32 to vector<4x16x1xf32>
    %15 = arith.divf %14, %13 : vector<4x16x1xf32>
    %16 = vector.shape_cast %11 : vector<4x16x8xf32> to vector<4x2x8x8xf32>
    %17 = vector.shape_cast %15 : vector<4x16x1xf32> to vector<4x2x8x1xf32>
    %18 = vector.extract_strided_slice %16 {offsets = [0, 0, 0, 0], sizes = [4, 1, 8, 8], strides = [1, 1, 1, 1]} : vector<4x2x8x8xf32> to vector<4x1x8x8xf32>
    %19 = vector.shape_cast %18 : vector<4x1x8x8xf32> to vector<4x8x8xf32>
    %20 = vector.extract_strided_slice %17 {offsets = [0, 0, 0, 0], sizes = [4, 1, 8, 1], strides = [1, 1, 1, 1]} : vector<4x2x8x1xf32> to vector<4x1x8x1xf32>
    %21 = vector.shape_cast %20 : vector<4x1x8x1xf32> to vector<4x8x1xf32>
    %22 = vector.broadcast %21 : vector<4x8x1xf32> to vector<4x8x8xf32>
    %23 = arith.mulf %19, %22 : vector<4x8x8xf32>
    %24 = vector.extract_strided_slice %16 {offsets = [0, 1, 0, 0], sizes = [4, 1, 8, 8], strides = [1, 1, 1, 1]} : vector<4x2x8x8xf32> to vector<4x1x8x8xf32>
    %25 = vector.shape_cast %24 : vector<4x1x8x8xf32> to vector<4x8x8xf32>
    %26 = vector.extract_strided_slice %17 {offsets = [0, 1, 0, 0], sizes = [4, 1, 8, 1], strides = [1, 1, 1, 1]} : vector<4x2x8x1xf32> to vector<4x1x8x1xf32>
    %27 = vector.shape_cast %26 : vector<4x1x8x1xf32> to vector<4x8x1xf32>
    %28 = vector.broadcast %0 : f32 to vector<4x8x1xf32>
    %29 = arith.mulf %28, %27 : vector<4x8x1xf32>
    %30 = vector.broadcast %29 : vector<4x8x1xf32> to vector<4x8x8xf32>
    %31 = arith.mulf %25, %30 : vector<4x8x8xf32>
    %32 = arith.subf %23, %31 : vector<4x8x8xf32>
    %33 = math.exp %32 : vector<4x8x8xf32>
    %cst_11 = arith.constant dense<0.000000e+00> : vector<4x8xf32>
    %34 = vector.multi_reduction <add>, %33, %cst_11 [2] : vector<4x8x8xf32> to vector<4x8xf32>
    %35 = vector.shape_cast %34 : vector<4x8xf32> to vector<4x8x1xf32>
    %cst_12 = arith.constant 1.000000e+00 : f32
    %36 = vector.broadcast %cst_12 : f32 to vector<4x8x1xf32>
    %37 = arith.divf %36, %35 : vector<4x8x1xf32>
    %38 = vector.broadcast %37 : vector<4x8x1xf32> to vector<4x8x8xf32>
    %39 = arith.mulf %33, %38 : vector<4x8x8xf32>
    %40 = arith.truncf %39 : vector<4x8x8xf32> to vector<4x8x8xbf16>
    %c0_13 = arith.constant 0 : index
    %c0_14 = arith.constant 0 : index
    %c0_15 = arith.constant 0 : index
    %c0_16 = arith.constant 0 : index
    %41 = vector.load %arg10[%c0_13, %c0_14, %c0_15, %c0_16] : memref<1x4x8x8xbf16, #tpu.memory_space<vmem>>, vector<1x4x8x8xbf16>
    %42 = vector.shape_cast %41 : vector<1x4x8x8xbf16> to vector<4x8x8xbf16>
    %43 = vector.shape_cast %40 : vector<4x8x8xbf16> to vector<1x4x8x8xbf16>
    tpu.vector_store %arg10[%c0_13, %c0_14, %c0_15, %c0_16], %43 {strides = array<i32>} : memref<1x4x8x8xbf16, #tpu.memory_space<vmem>>, vector<1x4x8x8xbf16>,
    %c0_17 = arith.constant 0 : index
    %c0_18 = arith.constant 0 : index
    %c0_19 = arith.constant 0 : index
    %c0_20 = arith.constant 0 : index
    %44 = vector.load %arg7[%c0_17, %c0_18, %c0_19, %c0_20] : memref<1x4x8x1xf32, #tpu.memory_space<vmem>>, vector<1x4x8x1xf32>
    %45 = vector.shape_cast %44 : vector<1x4x8x1xf32> to vector<4x8x1xf32>
    %cst_21 = arith.constant 5.000000e+00 : f32
    %46 = vector.broadcast %cst_21 : f32 to vector<4x8x1xf32>
    %47 = arith.mulf %45, %46 : vector<4x8x1xf32>
    %48 = arith.negf %47 : vector<4x8x1xf32>
    %49 = math.exp %48 : vector<4x8x1xf32>
    %cst_22 = arith.constant 1.000000e+00 : f32
    %50 = vector.broadcast %cst_22 : f32 to vector<4x8x1xf32>
    %51 = arith.addf %50, %49 : vector<4x8x1xf32>
    %52 = arith.divf %50, %51 : vector<4x8x1xf32>
    %cst_23 = arith.constant 9.99999974E-6 : f32
    %53 = vector.broadcast %cst_23 : f32 to vector<4x8x1xf32>
    %54 = arith.addf %52, %53 : vector<4x8x1xf32>
    %cst_24 = arith.constant 3.000000e+00 : f32
    %55 = vector.broadcast %cst_24 : f32 to vector<4x8x1xf32>
    %56 = math.powf %55, %54 : vector<4x8x1xf32>
    %cst_25 = arith.constant 1.000000e+00 : f32
    %57 = vector.broadcast %cst_25 : f32 to vector<4x8x1xf32>
    %58 = arith.subf %56, %57 : vector<4x8x1xf32>
    %c0_26 = arith.constant 0 : index
    %c0_27 = arith.constant 0 : index
    %c0_28 = arith.constant 0 : index
    %c0_29 = arith.constant 0 : index
    %59 = vector.load %arg12[%c0_26, %c0_27, %c0_28, %c0_29] : memref<1x4x8x1xf32, #tpu.memory_space<vmem>>, vector<1x4x8x1xf32>
    %60 = vector.shape_cast %59 : vector<1x4x8x1xf32> to vector<4x8x1xf32>
    %61 = vector.shape_cast %58 : vector<4x8x1xf32> to vector<1x4x8x1xf32>
    tpu.vector_store %arg12[%c0_26, %c0_27, %c0_28, %c0_29], %61 {strides = array<i32>} : memref<1x4x8x1xf32, #tpu.memory_space<vmem>>, vector<1x4x8x1xf32>,
    %62 = tpu.iota {dimensions = array<i32: 0>} : vector<8x8xi32>
    %c8_i32 = arith.constant 8 : i32
    %63 = arith.muli %arg2, %c8_i32 : i32
    %64 = vector.broadcast %63 : i32 to vector<8x8xi32>
    %65 = arith.addi %62, %64 : vector<8x8xi32>
    %66 = tpu.iota {dimensions = array<i32: 1>} : vector<8x8xi32>
    %67 = arith.subi %65, %66 : vector<8x8xi32>
    %68 = math.absi %67 : vector<8x8xi32>
    %69 = arith.sitofp %68 : vector<8x8xi32> to vector<8x8xf32>
    %70 = arith.mulf %69, %69 : vector<8x8xf32>
    %cst_30 = arith.constant -5.000000e-01 : f32
    %71 = vector.broadcast %cst_30 : f32 to vector<8x8xf32>
    %72 = arith.mulf %70, %71 : vector<8x8xf32>
    %cst_31 = arith.constant 1.000000e+00 : f32
    %73 = vector.broadcast %cst_31 : f32 to vector<4x8x1xf32>
    %74 = arith.divf %73, %58 : vector<4x8x1xf32>
    %cst_32 = arith.constant 0.398942292 : f32
    %75 = vector.broadcast %cst_32 : f32 to vector<4x8x1xf32>
    %76 = arith.mulf %75, %74 : vector<4x8x1xf32>
    %77 = vector.shape_cast %72 : vector<8x8xf32> to vector<1x8x8xf32>
    %78 = arith.mulf %74, %74 : vector<4x8x1xf32>
    %79 = vector.broadcast %77 : vector<1x8x8xf32> to vector<4x8x8xf32>
    %80 = vector.broadcast %78 : vector<4x8x1xf32> to vector<4x8x8xf32>
    %81 = arith.mulf %79, %80 : vector<4x8x8xf32>
    %82 = math.exp %81 : vector<4x8x8xf32>
    %83 = vector.broadcast %76 : vector<4x8x1xf32> to vector<4x8x8xf32>
    %84 = arith.mulf %83, %82 : vector<4x8x8xf32>
    %85 = arith.truncf %84 : vector<4x8x8xf32> to vector<4x8x8xbf16>
    %c0_33 = arith.constant 0 : index
    %c0_34 = arith.constant 0 : index
    %c0_35 = arith.constant 0 : index
    %c0_36 = arith.constant 0 : index
    %86 = vector.load %arg11[%c0_33, %c0_34, %c0_35, %c0_36] : memref<1x4x8x8xbf16, #tpu.memory_space<vmem>>, vector<1x4x8x8xbf16>
    %87 = vector.shape_cast %86 : vector<1x4x8x8xbf16> to vector<4x8x8xbf16>
    %88 = vector.shape_cast %85 : vector<4x8x8xbf16> to vector<1x4x8x8xbf16>
    tpu.vector_store %arg11[%c0_33, %c0_34, %c0_35, %c0_36], %88 {strides = array<i32>} : memref<1x4x8x8xbf16, #tpu.memory_space<vmem>>, vector<1x4x8x8xbf16>,
    %c0_37 = arith.constant 0 : index
    %c0_38 = arith.constant 0 : index
    %c0_39 = arith.constant 0 : index
    %c0_40 = arith.constant 0 : index
    %89 = vector.load %arg6[%c0_37, %c0_38, %c0_39, %c0_40] : memref<1x2x8x16xbf16, #tpu.memory_space<vmem>>, vector<1x2x8x16xbf16>
    %90 = vector.shape_cast %89 : vector<1x2x8x16xbf16> to vector<2x8x16xbf16>
    %91 = vector.shape_cast %32 : vector<4x8x8xf32> to vector<2x16x8xf32>
    %92 = arith.truncf %91 : vector<2x16x8xf32> to vector<2x16x8xbf16>
    "tpu.trace_start"() <{level = 10 : i32, message = "gql,gld->gqd"}> : () -> ()
    %cst_41 = arith.constant dense<0.000000e+00> : vector<2x16x16xf32>
    %93 = tpu.matmul %92, %90, %cst_41 {dimension_numbers = #tpu.dot_dimension_numbers<[2], [1], [1], [2], [0, 0, 0, 1, 1, 2], [0], [0]>} : vector<2x16x8xbf16>, vector<2x8x16xbf16>, vector<2x16x16xf32> -> vector<2x16x16xf32>
    "tpu.trace_stop"() : () -> ()
    %94 = vector.shape_cast %93 : vector<2x16x16xf32> to vector<4x8x16xf32>
    %95 = arith.mulf %94, %94 : vector<4x8x16xf32>
    %cst_42 = arith.constant dense<0.000000e+00> : vector<4x8xf32>
    %96 = vector.multi_reduction <add>, %95, %cst_42 [2] : vector<4x8x16xf32> to vector<4x8xf32>
    %97 = vector.shape_cast %96 : vector<4x8xf32> to vector<4x8x1xf32>
    %cst_43 = arith.constant 1.600000e+01 : f32
    %98 = vector.broadcast %cst_43 : f32 to vector<4x8x1xf32>
    %99 = arith.divf %97, %98 : vector<4x8x1xf32>
    %cst_44 = arith.constant 9.99999974E-6 : f32
    %100 = vector.broadcast %cst_44 : f32 to vector<4x8x1xf32>
    %101 = arith.addf %99, %100 : vector<4x8x1xf32>
    %102 = math.rsqrt %101 : vector<4x8x1xf32>
    %103 = vector.broadcast %102 : vector<4x8x1xf32> to vector<4x8x16xf32>
    %104 = arith.mulf %94, %103 : vector<4x8x16xf32>
    %c0_45 = arith.constant 0 : index
    %c0_46 = arith.constant 0 : index
    %105 = vector.load %arg8[%c0_45, %c0_46] : memref<1x16xf32, #tpu.memory_space<vmem>>, vector<1x16xf32>
    %106 = vector.shape_cast %105 : vector<1x16xf32> to vector<1x1x16xf32>
    %107 = vector.broadcast %106 : vector<1x1x16xf32> to vector<4x8x16xf32>
    %108 = arith.mulf %104, %107 : vector<4x8x16xf32>
    %cst_47 = arith.constant 0.644490957 : f32
    %109 = vector.broadcast %cst_47 : f32 to vector<4x8x16xf32>
    %110 = arith.mulf %108, %109 : vector<4x8x16xf32>
    %111 = vector.extract_strided_slice %110 {offsets = [0, 0, 0], sizes = [1, 8, 16], strides = [1, 1, 1]} : vector<4x8x16xf32> to vector<1x8x16xf32>
    %112 = vector.shape_cast %111 : vector<1x8x16xf32> to vector<8x16xf32>
    %113 = vector.extract_strided_slice %110 {offsets = [1, 0, 0], sizes = [1, 8, 16], strides = [1, 1, 1]} : vector<4x8x16xf32> to vector<1x8x16xf32>
    %114 = vector.shape_cast %113 : vector<1x8x16xf32> to vector<8x16xf32>
    %115 = vector.extract_strided_slice %110 {offsets = [2, 0, 0], sizes = [1, 8, 16], strides = [1, 1, 1]} : vector<4x8x16xf32> to vector<1x8x16xf32>
    %116 = vector.shape_cast %115 : vector<1x8x16xf32> to vector<8x16xf32>
    %117 = vector.extract_strided_slice %110 {offsets = [3, 0, 0], sizes = [1, 8, 16], strides = [1, 1, 1]} : vector<4x8x16xf32> to vector<1x8x16xf32>
    %118 = vector.shape_cast %117 : vector<1x8x16xf32> to vector<8x16xf32>
    %119 = tpu.concatenate %112, %114, %116, %118 in 1 : vector<8x16xf32>, vector<8x16xf32>, vector<8x16xf32>, vector<8x16xf32> -> vector<8x64xf32>
    %c0_48 = arith.constant 0 : index
    %c0_49 = arith.constant 0 : index
    %c0_50 = arith.constant 0 : index
    %120 = vector.load %arg9[%c0_48, %c0_49, %c0_50] : memref<1x8x64xf32, #tpu.memory_space<vmem>>, vector<1x8x64xf32>
    %121 = vector.shape_cast %120 : vector<1x8x64xf32> to vector<8x64xf32>
    %122 = vector.shape_cast %119 : vector<8x64xf32> to vector<1x8x64xf32>
    tpu.vector_store %arg9[%c0_48, %c0_49, %c0_50], %122 {strides = array<i32>} : memref<1x8x64xf32, #tpu.memory_space<vmem>>, vector<1x8x64xf32>,
    return
  }
  func.func @transform_0(%arg0: i32, %arg1: i32, %arg2: i32) -> i32 {
    %c0_i32 = arith.constant 0 : i32
    %c0_i32_0 = arith.constant 0 : i32
    return %c0_i32 : i32
  }
  func.func @transform_1(%arg0: i32, %arg1: i32, %arg2: i32) -> (i32, i32, i32, i32) {
    %c0_i32 = arith.constant 0 : i32
    %c0_i32_0 = arith.constant 0 : i32
    return %arg0, %arg1, %arg2, %c0_i32 : i32, i32, i32, i32
  }
  func.func @transform_2(%arg0: i32, %arg1: i32, %arg2: i32) -> (i32, i32, i32, i32) {
    %c0_i32 = arith.constant 0 : i32
    %c0_i32_0 = arith.constant 0 : i32
    %c0_i32_1 = arith.constant 0 : i32
    return %arg0, %arg1, %c0_i32, %c0_i32_0 : i32, i32, i32, i32
  }
  func.func @transform_3(%arg0: i32, %arg1: i32, %arg2: i32) -> (i32, i32, i32, i32) {
    %c0_i32 = arith.constant 0 : i32
    %c0_i32_0 = arith.constant 0 : i32
    %c0_i32_1 = arith.constant 0 : i32
    return %arg0, %arg1, %c0_i32, %c0_i32_0 : i32, i32, i32, i32
  }
  func.func @transform_4(%arg0: i32, %arg1: i32, %arg2: i32) -> (i32, i32, i32, i32) {
    %c0_i32 = arith.constant 0 : i32
    %c0_i32_0 = arith.constant 0 : i32
    return %arg0, %arg1, %arg2, %c0_i32 : i32, i32, i32, i32
  }
  func.func @transform_5(%arg0: i32, %arg1: i32, %arg2: i32) -> (i32, i32) {
    %c0_i32 = arith.constant 0 : i32
    %c0_i32_0 = arith.constant 0 : i32
    %c0_i32_1 = arith.constant 0 : i32
    return %c0_i32, %c0_i32_0 : i32, i32
  }
  func.func @transform_6(%arg0: i32, %arg1: i32, %arg2: i32) -> (i32, i32, i32) {
    %c0_i32 = arith.constant 0 : i32
    return %arg0, %arg2, %arg1 : i32, i32, i32
  }
  func.func @transform_7(%arg0: i32, %arg1: i32, %arg2: i32) -> (i32, i32, i32, i32) {
    %c0_i32 = arith.constant 0 : i32
    %c0_i32_0 = arith.constant 0 : i32
    return %arg0, %arg1, %arg2, %c0_i32 : i32, i32, i32, i32
  }
  func.func @transform_8(%arg0: i32, %arg1: i32, %arg2: i32) -> (i32, i32, i32, i32) {
    %c0_i32 = arith.constant 0 : i32
    %c0_i32_0 = arith.constant 0 : i32
    return %arg0, %arg1, %arg2, %c0_i32 : i32, i32, i32, i32
  }
  func.func @transform_9(%arg0: i32, %arg1: i32, %arg2: i32) -> (i32, i32, i32, i32) {
    %c0_i32 = arith.constant 0 : i32
    %c0_i32_0 = arith.constant 0 : i32
    return %arg0, %arg1, %arg2, %c0_i32 : i32, i32, i32, i32
  }
}

</mosaic_0001>

<llo_original>
// kernel: tpu_custom_call.1
$region0: #{tpu_custom_call.1}
  #allocation0 [shape = 'u32[]', space=smem, size = 0x4, offset = 0x4, fixed_abs, tag = 'smem constant byte address 0x4 - core index']
  #allocation1 [shape = 'u32[144,128]{1,0:T(1,128)}', space=vmem, size = 0x12000, scoped, tag = 'internal scratch']
  #allocation2 [shape = 'f32[1]{0:T(128)S(6)}', space=smem, size = 0x200, scoped, tag = 'scoped memory for tpu_custom_call.1']
  %s0 = inlined_call_operand.<no memory space> [shape: f32[1], index: 0, kind: input, shape index: {}]
  %s1 = inlined_call_operand.vmem [shape: bf16[2,8,8,8], index: 1, kind: input, shape index: {}]
  %s2 = inlined_call_operand.hbm [shape: bf16[2,4,8,8], index: 2, kind: input, shape index: {}]
  %s3 = inlined_call_operand.hbm [shape: bf16[2,2,8,16], index: 3, kind: input, shape index: {}]
  %s4 = inlined_call_operand.vmem [shape: f32[2,4,8,1], index: 4, kind: input, shape index: {}]
  %s5 = inlined_call_operand.vmem [shape: f32[1,16], index: 5, kind: input, shape index: {}]
  %s6 = inlined_call_operand.hbm [shape: f32[2,8,64], index: 6, kind: output, shape index: {0}]
  %s7 = inlined_call_operand.hbm [shape: bf16[2,4,8,8], index: 7, kind: output, shape index: {1}]
  %s8 = inlined_call_operand.hbm [shape: bf16[2,4,8,8], index: 8, kind: output, shape index: {2}]
  %s9 = inlined_call_operand.vmem [shape: f32[2,4,8,1], index: 9, kind: output, shape index: {3}]
  %10 = xla_tuple %s6, %s7, %s8, %s9
  %s11 = sld [smem:[#allocation0]]
  $region89: #{tpu_custom_call.1} parent=0
    _
  %s13 = ssub.s32 1, %s11
  %s14 = scalar_select 0, %s13, %s11
  %15 = sst [smem:[#allocation2]] %s0
  $region1: #{tpu_custom_call.1} parent=0
    #allocation3 [shape = 'u8[16384]{0}', space=vmem, size = 0x4000, scoped, tag = 'input window, operand 2']
    #allocation4 [shape = 's32[2]{0}', space=sflag, size = 0x8, scoped, tag = 'scoped memory for tpu_custom_call.1']
    #allocation5 [shape = 's32[2]{0}', space=sflag, size = 0x8, scoped, tag = 'scoped memory for tpu_custom_call.1']
    #allocation6 [shape = 'u8[8192]{0}', space=vmem, size = 0x2000, scoped, tag = 'input window, operand 3']
    #allocation7 [shape = 's32[2]{0}', space=sflag, size = 0x8, scoped, tag = 'scoped memory for tpu_custom_call.1']
    #allocation8 [shape = 'u8[8192]{0}', space=vmem, size = 0x2000, scoped, tag = 'output window, operand 0']
    #allocation9 [shape = 'u8[16384]{0}', space=vmem, size = 0x4000, scoped, tag = 'output window, operand 1']
    #allocation10 [shape = 's32[2]{0}', space=sflag, size = 0x8, scoped, tag = 'scoped memory for tpu_custom_call.1']
    #allocation11 [shape = 'u8[16384]{0}', space=vmem, size = 0x4000, scoped, tag = 'output window, operand 2']
    %16 = vsyncpa [#allocation4], 0
    %s17 = scalar_lea.sflag [#allocation4], 1
    %18 = vsyncpa %s17, 0
    %19 = vsyncpa [#allocation7], 0
    %s20 = scalar_lea.sflag [#allocation7], 1
    %21 = vsyncpa %s20, 0
    %22 = vsyncpa [#allocation5], 0
    %s23 = scalar_lea.sflag [#allocation5], 1
    %24 = vsyncpa %s23, 0
    %25 = vsyncpa [#allocation10], 0
    %s26 = scalar_lea.sflag [#allocation10], 1
    %27 = vsyncpa %s26, 0
    loop: start=0, step=1, limit=4
    $region2: #{tpu_custom_call.1} parent=1 // loop_pre_header
      _
    $region3: #{tpu_custom_call.1} parent=1 // loop_header
      %s29 = sphi 0, %s33
      %p30 = scmp.ge.s32.totalorder %s29, 4
      %s36 = sphi 0, %s55
      %s37 = sphi 0, %s51
      %s38 = sphi 0, %s47
      %s39 = sphi 0, %s36
      %s40 = sphi 0, %s37
      %s41 = sphi 0, %s38
      %s42 = sphi 0, %s39
      %s43 = sphi 0, %s40
      %s44 = sphi 0, %s41
      %s56 = sphi 0, %s56
      %s58 = sphi 0, %s56
      %s59 = sphi 0, %s58
      %s73 = sphi 0, %s59
      %s83 = sphi 0, %s85
      %s86 = sphi 0, %s83
      %s87 = sphi 0, %s86
      %s103 = sphi 0, %s87
      %s111 = sphi 0, %s113
      %s114 = sphi 0, %s111
      %s115 = sphi 0, %s114
      %s131 = sphi 0, %s115
      %s139 = sphi 0, %s141
      %s142 = sphi 0, %s139
      %s143 = sphi 0, %s142
      %s159 = sphi 0, %s143
      %s169 = sphi 0, %s171
      %s172 = sphi 0, %s169
      %s173 = sphi 0, %s172
      %s189 = sphi 0, %s173
      %s193 = sphi 0, %s193
      %s195 = sphi 0, %s193
      %s196 = sphi 0, %s195
      %s210 = sphi 0, %s196
      %s220 = sphi 0, %s222
      %s223 = sphi 0, %s220
      %s224 = sphi 0, %s223
      %s240 = sphi 0, %s224
      %s250 = sphi 0, %s252
      %s253 = sphi 0, %s250
      %s254 = sphi 0, %s253
      %s270 = sphi 0, %s254
      %s280 = sphi 0, %s282
      %s283 = sphi 0, %s280
      %s284 = sphi 0, %s283
      %s300 = sphi 0, %s284
      %s310 = sphi 0, %s312
      %s313 = sphi 0, %s310
      %s314 = sphi 0, %s313
      %s330 = sphi 0, %s314
    $region4: #{tpu_custom_call.1} parent=1 // loop_header_branch
      %32 = sbr.rel (%p30) target = $region8
    $region5: #{tpu_custom_call.1} parent=1 // loop_body
      %s34 = ssub.s32 %s29, 1
      %s35 = ssub.s32 %s29, 2
      %s45 = sadd.s32 1, %s38
      %p46 = scmp.ge.s32.totalorder %s45, 1
      %s47 = scalar_select %p46, 0, %s45
      %s48 = sadd.s32 1, %s37
      %s49 = scalar_select %p46, %s48, %s37
      %p50 = scmp.ge.s32.totalorder %s49, 1
      %s51 = scalar_select %p50, 0, %s49
      %s52 = sadd.s32 1, %s36
      %s53 = scalar_select %p50, %s52, %s36
      %p54 = scmp.ge.s32.totalorder %s53, 2
      %s55 = scalar_select %p54, 0, %s53
      %s57 = sadd.s32 %s56, 1
      %p60 = scmp.eq.s32.totalorder %s29, 1
      %p61 = scmp.ne.s32.totalorder %s56, %s58
      %p62 = scmp.eq.s32.totalorder %s29, 0
      %p63 = por %p61, %p62
      %p64 = scmp.ne.s32.totalorder %s56, %s58
      %p65 = scmp.eq.s32.totalorder %s34, 1
      %p66 = por %p64, %p65
      %p67 = scmp.ne.s32.totalorder %s58, %s59
      %p68 = scmp.eq.s32.totalorder %s34, 0
      %p69 = por %p67, %p68
      %p70 = scmp.ne.s32.totalorder %s58, %s59
      %p71 = scmp.eq.s32.totalorder %s35, 1
      %p72 = por %p70, %p71
      %p74 = scmp.ne.s32.totalorder %s59, %s73
      %p75 = scmp.eq.s32.totalorder %s35, 0
      %p76 = por %p74, %p75
      %s77 = ssub.s32 %s36, %s55
      %s78 = ssub.s32 %s37, %s51
      %s79 = sor.u32 %s77, %s78
      %s80 = ssub.s32 %s38, %s47
      %s81 = sor.u32 %s79, %s80
      %p82 = scmp.eq.s32.totalorder %s81, 0
      %s84 = sadd.s32 %s83, 1
      %s85 = scalar_select %p82, %s83, %s84
      %p88 = pneg %p82
      %p89 = scmp.eq.s32.totalorder %s29, 1
      %p90 = por %p88, %p89
      %p91 = scmp.ne.s32.totalorder %s83, %s86
      %p92 = scmp.eq.s32.totalorder %s29, 0
      %p93 = por %p91, %p92
      %p94 = scmp.ne.s32.totalorder %s83, %s86
      %p95 = scmp.eq.s32.totalorder %s34, 1
      %p96 = por %p94, %p95
      %p97 = scmp.ne.s32.totalorder %s86, %s87
      %p98 = scmp.eq.s32.totalorder %s34, 0
      %p99 = por %p97, %p98
      %p100 = scmp.ne.s32.totalorder %s86, %s87
      %p101 = scmp.eq.s32.totalorder %s35, 1
      %p102 = por %p100, %p101
      %p104 = scmp.ne.s32.totalorder %s87, %s103
      %p105 = scmp.eq.s32.totalorder %s35, 0
      %p106 = por %p104, %p105
      %s107 = ssub.s32 %s36, %s55
      %s108 = ssub.s32 %s37, %s51
      %s109 = sor.u32 %s107, %s108
      %p110 = scmp.eq.s32.totalorder %s109, 0
      %s112 = sadd.s32 %s111, 1
      %s113 = scalar_select %p110, %s111, %s112
      %p116 = pneg %p110
      %p117 = scmp.eq.s32.totalorder %s29, 1
      %p118 = por %p116, %p117
      %p119 = scmp.ne.s32.totalorder %s111, %s114
      %p120 = scmp.eq.s32.totalorder %s29, 0
      %p121 = por %p119, %p120
      %p122 = scmp.ne.s32.totalorder %s111, %s114
      %p123 = scmp.eq.s32.totalorder %s34, 1
      %p124 = por %p122, %p123
      %p125 = scmp.ne.s32.totalorder %s114, %s115
      %p126 = scmp.eq.s32.totalorder %s34, 0
      %p127 = por %p125, %p126
      %p128 = scmp.ne.s32.totalorder %s114, %s115
      %p129 = scmp.eq.s32.totalorder %s35, 1
      %p130 = por %p128, %p129
      %p132 = scmp.ne.s32.totalorder %s115, %s131
      %p133 = scmp.eq.s32.totalorder %s35, 0
      %p134 = por %p132, %p133
      %s135 = ssub.s32 %s36, %s55
      %s136 = ssub.s32 %s37, %s51
      %s137 = sor.u32 %s135, %s136
      %p138 = scmp.eq.s32.totalorder %s137, 0
      %s140 = sadd.s32 %s139, 1
      %s141 = scalar_select %p138, %s139, %s140
      %p144 = pneg %p138
      %p145 = scmp.eq.s32.totalorder %s29, 1
      %p146 = por %p144, %p145
      %p147 = scmp.ne.s32.totalorder %s139, %s142
      %p148 = scmp.eq.s32.totalorder %s29, 0
      %p149 = por %p147, %p148
      %p150 = scmp.ne.s32.totalorder %s139, %s142
      %p151 = scmp.eq.s32.totalorder %s34, 1
      %p152 = por %p150, %p151
      %p153 = scmp.ne.s32.totalorder %s142, %s143
      %p154 = scmp.eq.s32.totalorder %s34, 0
      %p155 = por %p153, %p154
      %p156 = scmp.ne.s32.totalorder %s142, %s143
      %p157 = scmp.eq.s32.totalorder %s35, 1
      %p158 = por %p156, %p157
      %p160 = scmp.ne.s32.totalorder %s143, %s159
      %p161 = scmp.eq.s32.totalorder %s35, 0
      %p162 = por %p160, %p161
      %s163 = ssub.s32 %s36, %s55
      %s164 = ssub.s32 %s37, %s51
      %s165 = sor.u32 %s163, %s164
      %s166 = ssub.s32 %s38, %s47
      %s167 = sor.u32 %s165, %s166
      %p168 = scmp.eq.s32.totalorder %s167, 0
      %s170 = sadd.s32 %s169, 1
      %s171 = scalar_select %p168, %s169, %s170
      %p174 = pneg %p168
      %p175 = scmp.eq.s32.totalorder %s29, 1
      %p176 = por %p174, %p175
      %p177 = scmp.ne.s32.totalorder %s169, %s172
      %p178 = scmp.eq.s32.totalorder %s29, 0
      %p179 = por %p177, %p178
      %p180 = scmp.ne.s32.totalorder %s169, %s172
      %p181 = scmp.eq.s32.totalorder %s34, 1
      %p182 = por %p180, %p181
      %p183 = scmp.ne.s32.totalorder %s172, %s173
      %p184 = scmp.eq.s32.totalorder %s34, 0
      %p185 = por %p183, %p184
      %p186 = scmp.ne.s32.totalorder %s172, %s173
      %p187 = scmp.eq.s32.totalorder %s35, 1
      %p188 = por %p186, %p187
      %p190 = scmp.ne.s32.totalorder %s173, %s189
      %p191 = scmp.eq.s32.totalorder %s35, 0
      %p192 = por %p190, %p191
      %s194 = sadd.s32 %s193, 1
      %p197 = scmp.eq.s32.totalorder %s29, 1
      %p198 = scmp.ne.s32.totalorder %s193, %s195
      %p199 = scmp.eq.s32.totalorder %s29, 0
      %p200 = por %p198, %p199
      %p201 = scmp.ne.s32.totalorder %s193, %s195
      %p202 = scmp.eq.s32.totalorder %s34, 1
      %p203 = por %p201, %p202
      %p204 = scmp.ne.s32.totalorder %s195, %s196
      %p205 = scmp.eq.s32.totalorder %s34, 0
      %p206 = por %p204, %p205
      %p207 = scmp.ne.s32.totalorder %s195, %s196
      %p208 = scmp.eq.s32.totalorder %s35, 1
      %p209 = por %p207, %p208
      %p211 = scmp.ne.s32.totalorder %s196, %s210
      %p212 = scmp.eq.s32.totalorder %s35, 0
      %p213 = por %p211, %p212
      %s214 = ssub.s32 %s36, %s55
      %s215 = ssub.s32 %s38, %s47
      %s216 = sor.u32 %s214, %s215
      %s217 = ssub.s32 %s37, %s51
      %s218 = sor.u32 %s216, %s217
      %p219 = scmp.eq.s32.totalorder %s218, 0
      %s221 = sadd.s32 %s220, 1
      %s222 = scalar_select %p219, %s220, %s221
      %p225 = pneg %p219
      %p226 = scmp.eq.s32.totalorder %s29, 1
      %p227 = por %p225, %p226
      %p228 = scmp.ne.s32.totalorder %s220, %s223
      %p229 = scmp.eq.s32.totalorder %s29, 0
      %p230 = por %p228, %p229
      %p231 = scmp.ne.s32.totalorder %s220, %s223
      %p232 = scmp.eq.s32.totalorder %s34, 1
      %p233 = por %p231, %p232
      %p234 = scmp.ne.s32.totalorder %s223, %s224
      %p235 = scmp.eq.s32.totalorder %s34, 0
      %p236 = por %p234, %p235
      %p237 = scmp.ne.s32.totalorder %s223, %s224
      %p238 = scmp.eq.s32.totalorder %s35, 1
      %p239 = por %p237, %p238
      %p241 = scmp.ne.s32.totalorder %s224, %s240
      %p242 = scmp.eq.s32.totalorder %s35, 0
      %p243 = por %p241, %p242
      %s244 = ssub.s32 %s36, %s55
      %s245 = ssub.s32 %s37, %s51
      %s246 = sor.u32 %s244, %s245
      %s247 = ssub.s32 %s38, %s47
      %s248 = sor.u32 %s246, %s247
      %p249 = scmp.eq.s32.totalorder %s248, 0
      %s251 = sadd.s32 %s250, 1
      %s252 = scalar_select %p249, %s250, %s251
      %p255 = pneg %p249
      %p256 = scmp.eq.s32.totalorder %s29, 1
      %p257 = por %p255, %p256
      %p258 = scmp.ne.s32.totalorder %s250, %s253
      %p259 = scmp.eq.s32.totalorder %s29, 0
      %p260 = por %p258, %p259
      %p261 = scmp.ne.s32.totalorder %s250, %s253
      %p262 = scmp.eq.s32.totalorder %s34, 1
      %p263 = por %p261, %p262
      %p264 = scmp.ne.s32.totalorder %s253, %s254
      %p265 = scmp.eq.s32.totalorder %s34, 0
      %p266 = por %p264, %p265
      %p267 = scmp.ne.s32.totalorder %s253, %s254
      %p268 = scmp.eq.s32.totalorder %s35, 1
      %p269 = por %p267, %p268
      %p271 = scmp.ne.s32.totalorder %s254, %s270
      %p272 = scmp.eq.s32.totalorder %s35, 0
      %p273 = por %p271, %p272
      %s274 = ssub.s32 %s36, %s55
      %s275 = ssub.s32 %s37, %s51
      %s276 = sor.u32 %s274, %s275
      %s277 = ssub.s32 %s38, %s47
      %s278 = sor.u32 %s276, %s277
      %p279 = scmp.eq.s32.totalorder %s278, 0
      %s281 = sadd.s32 %s280, 1
      %s282 = scalar_select %p279, %s280, %s281
      %p285 = pneg %p279
      %p286 = scmp.eq.s32.totalorder %s29, 1
      %p287 = por %p285, %p286
      %p288 = scmp.ne.s32.totalorder %s280, %s283
      %p289 = scmp.eq.s32.totalorder %s29, 0
      %p290 = por %p288, %p289
      %p291 = scmp.ne.s32.totalorder %s280, %s283
      %p292 = scmp.eq.s32.totalorder %s34, 1
      %p293 = por %p291, %p292
      %p294 = scmp.ne.s32.totalorder %s283, %s284
      %p295 = scmp.eq.s32.totalorder %s34, 0
      %p296 = por %p294, %p295
      %p297 = scmp.ne.s32.totalorder %s283, %s284
      %p298 = scmp.eq.s32.totalorder %s35, 1
      %p299 = por %p297, %p298
      %p301 = scmp.ne.s32.totalorder %s284, %s300
      %p302 = scmp.eq.s32.totalorder %s35, 0
      %p303 = por %p301, %p302
      %s304 = ssub.s32 %s36, %s55
      %s305 = ssub.s32 %s37, %s51
      %s306 = sor.u32 %s304, %s305
      %s307 = ssub.s32 %s38, %s47
      %s308 = sor.u32 %s306, %s307
      %p309 = scmp.eq.s32.totalorder %s308, 0
      %s311 = sadd.s32 %s310, 1
      %s312 = scalar_select %p309, %s310, %s311
      %p315 = pneg %p309
      %p316 = scmp.eq.s32.totalorder %s29, 1
      %p317 = por %p315, %p316
      %p318 = scmp.ne.s32.totalorder %s310, %s313
      %p319 = scmp.eq.s32.totalorder %s29, 0
      %p320 = por %p318, %p319
      %p321 = scmp.ne.s32.totalorder %s310, %s313
      %p322 = scmp.eq.s32.totalorder %s34, 1
      %p323 = por %p321, %p322
      %p324 = scmp.ne.s32.totalorder %s313, %s314
      %p325 = scmp.eq.s32.totalorder %s34, 0
      %p326 = por %p324, %p325
      %p327 = scmp.ne.s32.totalorder %s313, %s314
      %p328 = scmp.eq.s32.totalorder %s35, 1
      %p329 = por %p327, %p328
      %p331 = scmp.ne.s32.totalorder %s314, %s330
      %p332 = scmp.eq.s32.totalorder %s35, 0
      %p333 = por %p331, %p332
      %p334 = scmp.le.s32.totalorder 1, %s29
      %p335 = scmp.lt.s32.totalorder %s29, 3
      %p336 = pnand %p334, %p335
      %p337 = pneg %p336
      // Predicated region
      $region9: #{tpu_custom_call.1} parent=5 // pred_check
        _
      $region10: #{tpu_custom_call.1} parent=5 // pred_check_branch
        %339 = sbr.rel (%p336) target = $region12
      $region11: #{tpu_custom_call.1} parent=5 // pred_region
        %s340 = ssub.s32 %s29, 1
        // Predicated region
        $region13: #{tpu_custom_call.1} parent=11 // pred_check
          %p341 = pneg %p69
        $region14: #{tpu_custom_call.1} parent=11 // pred_check_branch
          %343 = sbr.rel (%p341) target = $region16
        $region15: #{tpu_custom_call.1} parent=11 // pred_region
          _
        $region16: #{tpu_custom_call.1} parent=11 // pred_fallthru
          _
        // Predicated region
        $region17: #{tpu_custom_call.1} parent=11 // pred_check
          %p344 = pneg %p206
        $region18: #{tpu_custom_call.1} parent=11 // pred_check_branch
          %346 = sbr.rel (%p344) target = $region20
        $region19: #{tpu_custom_call.1} parent=11 // pred_region
          _
        $region20: #{tpu_custom_call.1} parent=11 // pred_fallthru
          _
      $region12: #{tpu_custom_call.1} parent=5 // pred_fallthru
        _
      %p347 = scmp.lt.s32.totalorder %s29, 2
      // Predicated region
      $region21: #{tpu_custom_call.1} parent=5 // pred_check
        %p348 = pneg %p347
      $region22: #{tpu_custom_call.1} parent=5 // pred_check_branch
        %350 = sbr.rel (%p348) target = $region24
      $region23: #{tpu_custom_call.1} parent=5 // pred_region
        // Predicated region
        $region25: #{tpu_custom_call.1} parent=23 // pred_check
          %p351 = pneg %p93
        $region26: #{tpu_custom_call.1} parent=23 // pred_check_branch
          %353 = sbr.rel (%p351) target = $region28
        $region27: #{tpu_custom_call.1} parent=23 // pred_region
          %s354 = smul.u32 8, %s37
          %p355 = scmp.lt.s32.totalorder %s36, 1
          %s356 = scalar_select %p355, %s36, 1
          %p357 = scmp.lt.s32.totalorder %s354, 7
          %s358 = scalar_select %p357, %s354, 7
          %p359 = scmp.lt.s32.totalorder %s38, 0
          %s360 = scalar_select %p359, %s38, 0
          %s361 = sadd.s32 %s360, %s358
          %s362 = smul.addr %s356, 8
          %s363 = sadd.s32 %s361, %s362
          %s364 = smul.addr %s363, 4
          %s365 = scalar_lea.vmem %s1, %s364
          %s366 = smul.u32 8, %s37
        $region28: #{tpu_custom_call.1} parent=23 // pred_fallthru
          _
        // Predicated region
        $region29: #{tpu_custom_call.1} parent=23 // pred_check
          %p367 = pneg %p121
        $region30: #{tpu_custom_call.1} parent=23 // pred_check_branch
          %369 = sbr.rel (%p367) target = $region32
        $region31: #{tpu_custom_call.1} parent=23 // pred_region
          %s370 = sand.u32 %s111, 1
          %s371 = scalar_lea.sflag [#allocation4], %s370
          %s372 = sand.u32 %s111, 1
          %s373 = smul.addr %s372, 16
          %s374 = scalar_lea.vmem [#allocation3], %s373
          %s375 = smul.u32 4, %s37
          %s377 = ssub.s32 256, 256
          %378 = vsyncadd %s371, %s377
          %s379 = smul.addr %s36, 4
          %s380 = sadd.s32 %s375, %s379
          %s381 = smul.addr %s380, 64
          %s382 = scalar_lea.hbm %s2, %s381
          %s383 = sshll.u32 %s374, 4
          %s384 = int_to_ptr.vmem [resolvable:$true] %s383
          %389 = dma.hbm_to_vmem [thread:$0]  %s382, 256, %s384, %s371, 64, 64, 4
        $region32: #{tpu_custom_call.1} parent=23 // pred_fallthru
          _
        // Predicated region
        $region33: #{tpu_custom_call.1} parent=23 // pred_check
          %p390 = pneg %p149
        $region34: #{tpu_custom_call.1} parent=23 // pred_check_branch
          %392 = sbr.rel (%p390) target = $region36
        $region35: #{tpu_custom_call.1} parent=23 // pred_region
          %s393 = sand.u32 %s139, 1
          %s394 = scalar_lea.sflag [#allocation7], %s393
          %s395 = sand.u32 %s139, 1
          %s396 = smul.addr %s395, 8
          %s397 = scalar_lea.vmem [#allocation6], %s396
          %s398 = smul.u32 2, %s37
          %s400 = ssub.s32 128, 128
          %401 = vsyncadd %s394, %s400
          %s402 = smul.addr %s36, 2
          %s403 = sadd.s32 %s398, %s402
          %s404 = smul.addr %s403, 64
          %s405 = scalar_lea.hbm %s3, %s404
          %s406 = sshll.u32 %s397, 4
          %s407 = int_to_ptr.vmem [resolvable:$true] %s406
          %412 = dma.hbm_to_vmem [thread:$0]  %s405, 128, %s407, %s394, 64, 64, 4
        $region36: #{tpu_custom_call.1} parent=23 // pred_fallthru
          _
        // Predicated region
        $region37: #{tpu_custom_call.1} parent=23 // pred_check
          %p413 = pneg %p179
        $region38: #{tpu_custom_call.1} parent=23 // pred_check_branch
          %415 = sbr.rel (%p413) target = $region40
        $region39: #{tpu_custom_call.1} parent=23 // pred_region
          %s416 = smul.u32 4, %s37
          %p417 = scmp.lt.s32.totalorder %s36, 1
          %s418 = scalar_select %p417, %s36, 1
          %p419 = scmp.lt.s32.totalorder %s416, 3
          %s420 = scalar_select %p419, %s416, 3
          %p421 = scmp.lt.s32.totalorder %s38, 0
          %s422 = scalar_select %p421, %s38, 0
          %s423 = sadd.s32 %s422, %s420
          %s424 = smul.addr %s418, 4
          %s425 = sadd.s32 %s423, %s424
          %s426 = smul.addr %s425, 8
          %s427 = scalar_lea.vmem %s4, %s426
          %s428 = smul.u32 4, %s37
        $region40: #{tpu_custom_call.1} parent=23 // pred_fallthru
          _
      $region24: #{tpu_custom_call.1} parent=5 // pred_fallthru
        _
      %p429 = scmp.le.s32.totalorder 1, %s29
      %p430 = scmp.lt.s32.totalorder %s29, 3
      %p431 = pnand %p429, %p430
      %p432 = pneg %p431
      // Predicated region
      $region41: #{tpu_custom_call.1} parent=5 // pred_check
        _
      $region42: #{tpu_custom_call.1} parent=5 // pred_check_branch
        %434 = sbr.rel (%p431) target = $region44
      $region43: #{tpu_custom_call.1} parent=5 // pred_region
        %s435 = ssub.s32 %s29, 1
        %s436 = sand.u32 %s114, 1
        %s437 = scalar_lea.sflag [#allocation4], %s436
        %s438 = sand.u32 %s114, 1
        %s439 = smul.addr %s438, 16
        %s440 = scalar_lea.vmem [#allocation3], %s439
        // Predicated region
        $region45: #{tpu_custom_call.1} parent=43 // pred_check
          %p441 = pneg %p127
        $region46: #{tpu_custom_call.1} parent=43 // pred_check_branch
          %443 = sbr.rel (%p441) target = $region48
        $region47: #{tpu_custom_call.1} parent=43 // pred_region
          %444 = dma.done %s437, 256
        $region48: #{tpu_custom_call.1} parent=43 // pred_fallthru
          _
        %s445 = sand.u32 %s142, 1
        %s446 = scalar_lea.sflag [#allocation7], %s445
        %s447 = sand.u32 %s142, 1
        %s448 = smul.addr %s447, 8
        %s449 = scalar_lea.vmem [#allocation6], %s448
        // Predicated region
        $region49: #{tpu_custom_call.1} parent=43 // pred_check
          %p450 = pneg %p155
        $region50: #{tpu_custom_call.1} parent=43 // pred_check_branch
          %452 = sbr.rel (%p450) target = $region52
        $region51: #{tpu_custom_call.1} parent=43 // pred_region
          %453 = dma.done %s446, 128
        $region52: #{tpu_custom_call.1} parent=43 // pred_fallthru
          _
        %p454 = pneg %p69
        %p455 = pneg %p66
        %s456 = smul.u32 8, %s40
        %p457 = scmp.lt.s32.totalorder %s39, 1
        %s458 = scalar_select %p457, %s39, 1
        %p459 = scmp.lt.s32.totalorder %s456, 7
        %s460 = scalar_select %p459, %s456, 7
        %p461 = scmp.lt.s32.totalorder %s41, 0
        %s462 = scalar_select %p461, %s41, 0
        %s463 = sadd.s32 %s462, %s460
        %s464 = smul.addr %s458, 8
        %s465 = sadd.s32 %s463, %s464
        %s466 = smul.addr %s465, 4
        %s467 = scalar_lea.vmem %s1, %s466
        %p468 = pneg %p99
        %p469 = pneg %p96
        %s470 = sand.u32 %s114, 1
        %s471 = scalar_lea.sflag [#allocation4], %s470
        %s472 = sand.u32 %s114, 1
        %s473 = smul.addr %s472, 16
        %s474 = scalar_lea.vmem [#allocation3], %s473
        %p475 = pneg %p127
        %p476 = pneg %p124
        %s477 = sand.u32 %s142, 1
        %s478 = scalar_lea.sflag [#allocation7], %s477
        %s479 = sand.u32 %s142, 1
        %s480 = smul.addr %s479, 8
        %s481 = scalar_lea.vmem [#allocation6], %s480
        %p482 = pneg %p155
        %p483 = pneg %p152
        %s484 = smul.u32 4, %s40
        %p485 = scmp.lt.s32.totalorder %s39, 1
        %s486 = scalar_select %p485, %s39, 1
        %p487 = scmp.lt.s32.totalorder %s484, 3
        %s488 = scalar_select %p487, %s484, 3
        %p489 = scmp.lt.s32.totalorder %s41, 0
        %s490 = scalar_select %p489, %s41, 0
        %s491 = sadd.s32 %s490, %s488
        %s492 = smul.addr %s486, 4
        %s493 = sadd.s32 %s491, %s492
        %s494 = smul.addr %s493, 8
        %s495 = scalar_lea.vmem %s4, %s494
        %p496 = pneg %p185
        %p497 = pneg %p182
        %p498 = pneg %p206
        %p499 = pneg %p203
        %p500 = pneg %p236
        %p501 = pneg %p233
        %s502 = sand.u32 %s223, 1
        %s503 = scalar_lea.sflag [#allocation5], %s502
        %s504 = sand.u32 %s223, 1
        %s505 = smul.addr %s504, 8
        %s506 = scalar_lea.vmem [#allocation8], %s505
        %p507 = pneg %p266
        %p508 = pneg %p263
        %s509 = sand.u32 %s34, 1
        %s510 = scalar_lea.sflag [#allocation10], %s509
        %s511 = sand.u32 %s253, 1
        %s512 = smul.addr %s511, 16
        %s513 = scalar_lea.vmem [#allocation9], %s512
        %p514 = pneg %p296
        %p515 = pneg %p293
        %s516 = sand.u32 %s34, 1
        %s517 = scalar_lea.sflag [#allocation10], %s516
        %s518 = sand.u32 %s283, 1
        %s519 = smul.addr %s518, 16
        %s520 = scalar_lea.vmem [#allocation11], %s519
        %p521 = pneg %p326
        %p522 = pneg %p323
        %s523 = smul.u32 4, %s40
        %p524 = scmp.lt.s32.totalorder %s39, 1
        %s525 = scalar_select %p524, %s39, 1
        %p526 = scmp.lt.s32.totalorder %s523, 3
        %s527 = scalar_select %p526, %s523, 3
        %p528 = scmp.lt.s32.totalorder %s41, 0
        %s529 = scalar_select %p528, %s41, 0
        %s530 = sadd.s32 %s529, %s527
        %s531 = smul.addr %s525, 4
        %s532 = sadd.s32 %s530, %s531
        %s533 = smul.addr %s532, 8
        %s534 = scalar_lea.vmem %s9, %s533
        %s535 = smul.u32 8, %s40
        %p536 = scmp.lt.s32.totalorder %s39, 1
        %s537 = scalar_select %p536, %s39, 1
        %p538 = scmp.lt.s32.totalorder %s535, 7
        %s539 = scalar_select %p538, %s535, 7
        %p540 = scmp.lt.s32.totalorder %s41, 0
        %s541 = scalar_select %p540, %s41, 0
        %s542 = sadd.s32 %s541, %s539
        %s543 = smul.addr %s537, 8
        %s544 = sadd.s32 %s542, %s543
        %s545 = smul.addr %s544, 4
        %s546 = scalar_lea.vmem %s1, %s545
        %s547 = smul.u32 8, %s40
        %s548 = smul.u32 4, %s40
        %s549 = smul.u32 2, %s40
        %s550 = smul.u32 4, %s40
        %p551 = scmp.lt.s32.totalorder %s39, 1
        %s552 = scalar_select %p551, %s39, 1
        %p553 = scmp.lt.s32.totalorder %s550, 3
        %s554 = scalar_select %p553, %s550, 3
        %p555 = scmp.lt.s32.totalorder %s41, 0
        %s556 = scalar_select %p555, %s41, 0
        %s557 = sadd.s32 %s556, %s554
        %s558 = smul.addr %s552, 4
        %s559 = sadd.s32 %s557, %s558
        %s560 = smul.addr %s559, 8
        %s561 = scalar_lea.vmem %s4, %s560
        %s562 = smul.u32 4, %s40
        %s563 = smul.u32 4, %s40
        %s564 = smul.u32 4, %s40
        %s565 = smul.u32 4, %s40
        %p566 = scmp.lt.s32.totalorder %s39, 1
        %s567 = scalar_select %p566, %s39, 1
        %p568 = scmp.lt.s32.totalorder %s565, 3
        %s569 = scalar_select %p568, %s565, 3
        %p570 = scmp.lt.s32.totalorder %s41, 0
        %s571 = scalar_select %p570, %s41, 0
        %s572 = sadd.s32 %s571, %s569
        %s573 = smul.addr %s567, 4
        %s574 = sadd.s32 %s572, %s573
        %s575 = smul.addr %s574, 8
        %s576 = scalar_lea.vmem %s9, %s575
        %s577 = smul.u32 4, %s40
        %s579 = sld [smem:[#allocation2]]
        %v580 = vld [vmem:[%s546] sm:$0xf]
        %v581 = vld [vmem:[%s546 + $0x4] sm:$0xf]
        %v582 = vld [vmem:[%s546 + $0x8] sm:$0xf]
        %v583 = vld [vmem:[%s546 + $0xc] sm:$0xf]
        %v584 = vld [vmem:[%s546 + $0x10] sm:$0xf]
        %v585 = vld [vmem:[%s546 + $0x14] sm:$0xf]
        %v586 = vld [vmem:[%s546 + $0x18] sm:$0xf]
        %v587 = vld [vmem:[%s546 + $0x1c] sm:$0xf]
        %v588 = vld [vmem:[%s440] sm:$0xf]
        %v589 = vld [vmem:[%s440 + $0x4] sm:$0xf]
        %v590 = vld [vmem:[%s440 + $0x8] sm:$0xf]
        %v591 = vld [vmem:[%s440 + $0xc] sm:$0xf]
        %v594 = vunpack.c.l.b16 %v580
        %v595 = vunpack.c.l.b16 %v581
        %v596 = vpack.c.b16 %v595, %v594
        %vm597 = vcmask 64512
        %v599 = vsel %vm597, %v596, 0
        %v602 = vsel %vm597, %v588, 0
        %604 = vmatprep.subr.bf16.mxu0 0
        %605 = vmatpush1.bf16.xpose.msra.mxu0 0
        %606 = vmatprep.subr.bf16.mxu0 0
        %607 = vmatpush1.bf16.xpose.msra.mxu0 0
        %608 = vmatprep.subr.bf16.mxu0 0
        %609 = vmatpush1.bf16.xpose.msra.mxu0 0
        %610 = vmatprep.subr.bf16.mxu0 0
        %611 = vmatpush1.bf16.xpose.msra.mxu0 0
        %612 = vmatprep.subr.bf16.mxu0 0
        %613 = vmatpush1.bf16.xpose.msra.mxu0 0
        %614 = vmatprep.subr.bf16.mxu0 0
        %615 = vmatpush1.bf16.xpose.msra.mxu0 0
        %616 = vmatprep.subr.bf16.mxu0 0
        %617 = vmatpush1.bf16.xpose.msra.mxu0 0
        %618 = vmatprep.subr.bf16.mxu0 0
        %619 = vmatpush1.bf16.xpose.msra.mxu0 %v602
        %620 = vmatprep.subr.bf16.mxu0 0
        %621 = vmatpush2.bf16.xpose.msra.mxu0 0
        %622 = vmatprep.subr.bf16.mxu0 0
        %623 = vmatpush2.bf16.xpose.msra.mxu0 0
        %624 = vmatprep.subr.bf16.mxu0 0
        %625 = vmatpush2.bf16.xpose.msra.mxu0 0
        %626 = vmatprep.subr.bf16.mxu0 0
        %627 = vmatpush2.bf16.xpose.msra.mxu0 0
        %628 = vmatprep.subr.bf16.mxu0 0
        %629 = vmatpush2.bf16.xpose.msra.mxu0 0
        %630 = vmatprep.subr.bf16.mxu0 0
        %631 = vmatpush2.bf16.xpose.msra.mxu0 0
        %632 = vmatprep.subr.bf16.mxu0 0
        %633 = vmatpush2.bf16.xpose.msra.mxu0 0
        %634 = vmatprep.subr.bf16.mxu0 0
        %635 = vmatpush2.bf16.xpose.msra.mxu0 0
        %636 = vmatprep.mubr.bf16.mxu0 0
        %637 = vmatmul.mubr.bf16.gmra.mxu0 %v599
        %v638 = vpop.f32.mrf.mxu0
        %v639 = vadd.f32 0.0, %v638
        %v640 = vpop.f32.mrf.mxu0
        %v641 = vpop.f32.mrf.mxu0
        %v642 = vadd.f32 0.0, %v641
        %v643 = vpop.f32.mrf.mxu0
        %644 = vdwg.mxu0
        %v647 = vunpack.c.l.b16 %v582
        %v648 = vunpack.c.l.b16 %v583
        %v649 = vpack.c.b16 %v648, %v647
        %v651 = vsel %vm597, %v649, 0
        %v654 = vsel %vm597, %v589, 0
        %656 = vmatprep.subr.bf16.mxu0 0
        %657 = vmatpush1.bf16.xpose.msra.mxu0 0
        %658 = vmatprep.subr.bf16.mxu0 0
        %659 = vmatpush1.bf16.xpose.msra.mxu0 0
        %660 = vmatprep.subr.bf16.mxu0 0
        %661 = vmatpush1.bf16.xpose.msra.mxu0 0
        %662 = vmatprep.subr.bf16.mxu0 0
        %663 = vmatpush1.bf16.xpose.msra.mxu0 0
        %664 = vmatprep.subr.bf16.mxu0 0
        %665 = vmatpush1.bf16.xpose.msra.mxu0 0
        %666 = vmatprep.subr.bf16.mxu0 0
        %667 = vmatpush1.bf16.xpose.msra.mxu0 0
        %668 = vmatprep.subr.bf16.mxu0 0
        %669 = vmatpush1.bf16.xpose.msra.mxu0 0
        %670 = vmatprep.subr.bf16.mxu0 0
        %671 = vmatpush1.bf16.xpose.msra.mxu0 %v654
        %672 = vmatprep.subr.bf16.mxu0 0
        %673 = vmatpush2.bf16.xpose.msra.mxu0 0
        %674 = vmatprep.subr.bf16.mxu0 0
        %675 = vmatpush2.bf16.xpose.msra.mxu0 0
        %676 = vmatprep.subr.bf16.mxu0 0
        %677 = vmatpush2.bf16.xpose.msra.mxu0 0
        %678 = vmatprep.subr.bf16.mxu0 0
        %679 = vmatpush2.bf16.xpose.msra.mxu0 0
        %680 = vmatprep.subr.bf16.mxu0 0
        %681 = vmatpush2.bf16.xpose.msra.mxu0 0
        %682 = vmatprep.subr.bf16.mxu0 0
        %683 = vmatpush2.bf16.xpose.msra.mxu0 0
        %684 = vmatprep.subr.bf16.mxu0 0
        %685 = vmatpush2.bf16.xpose.msra.mxu0 0
        %686 = vmatprep.subr.bf16.mxu0 0
        %687 = vmatpush2.bf16.xpose.msra.mxu0 0
        %688 = vmatprep.mubr.bf16.mxu0 0
        %689 = vmatmul.mubr.bf16.gmra.mxu0 %v651
        %v690 = vpop.f32.mrf.mxu0
        %v691 = vadd.f32 0.0, %v690
        %v692 = vpop.f32.mrf.mxu0
        %v693 = vpop.f32.mrf.mxu0
        %v694 = vadd.f32 0.0, %v693
        %v695 = vpop.f32.mrf.mxu0
        %696 = vdwg.mxu0
        %v699 = vunpack.c.l.b16 %v584
        %v700 = vunpack.c.l.b16 %v585
        %v701 = vpack.c.b16 %v700, %v699
        %v703 = vsel %vm597, %v701, 0
        %v706 = vsel %vm597, %v590, 0
        %708 = vmatprep.subr.bf16.mxu0 0
        %709 = vmatpush1.bf16.xpose.msra.mxu0 0
        %710 = vmatprep.subr.bf16.mxu0 0
        %711 = vmatpush1.bf16.xpose.msra.mxu0 0
        %712 = vmatprep.subr.bf16.mxu0 0
        %713 = vmatpush1.bf16.xpose.msra.mxu0 0
        %714 = vmatprep.subr.bf16.mxu0 0
        %715 = vmatpush1.bf16.xpose.msra.mxu0 0
        %716 = vmatprep.subr.bf16.mxu0 0
        %717 = vmatpush1.bf16.xpose.msra.mxu0 0
        %718 = vmatprep.subr.bf16.mxu0 0
        %719 = vmatpush1.bf16.xpose.msra.mxu0 0
        %720 = vmatprep.subr.bf16.mxu0 0
        %721 = vmatpush1.bf16.xpose.msra.mxu0 0
        %722 = vmatprep.subr.bf16.mxu0 0
        %723 = vmatpush1.bf16.xpose.msra.mxu0 %v706
        %724 = vmatprep.subr.bf16.mxu0 0
        %725 = vmatpush2.bf16.xpose.msra.mxu0 0
        %726 = vmatprep.subr.bf16.mxu0 0
        %727 = vmatpush2.bf16.xpose.msra.mxu0 0
        %728 = vmatprep.subr.bf16.mxu0 0
        %729 = vmatpush2.bf16.xpose.msra.mxu0 0
        %730 = vmatprep.subr.bf16.mxu0 0
        %731 = vmatpush2.bf16.xpose.msra.mxu0 0
        %732 = vmatprep.subr.bf16.mxu0 0
        %733 = vmatpush2.bf16.xpose.msra.mxu0 0
        %734 = vmatprep.subr.bf16.mxu0 0
        %735 = vmatpush2.bf16.xpose.msra.mxu0 0
        %736 = vmatprep.subr.bf16.mxu0 0
        %737 = vmatpush2.bf16.xpose.msra.mxu0 0
        %738 = vmatprep.subr.bf16.mxu0 0
        %739 = vmatpush2.bf16.xpose.msra.mxu0 0
        %740 = vmatprep.mubr.bf16.mxu0 0
        %741 = vmatmul.mubr.bf16.gmra.mxu0 %v703
        %v742 = vpop.f32.mrf.mxu0
        %v743 = vadd.f32 0.0, %v742
        %v744 = vpop.f32.mrf.mxu0
        %v745 = vpop.f32.mrf.mxu0
        %v746 = vadd.f32 0.0, %v745
        %v747 = vpop.f32.mrf.mxu0
        %748 = vdwg.mxu0
        %v751 = vunpack.c.l.b16 %v586
        %v752 = vunpack.c.l.b16 %v587
        %v753 = vpack.c.b16 %v752, %v751
        %v755 = vsel %vm597, %v753, 0
        %v758 = vsel %vm597, %v591, 0
        %760 = vmatprep.subr.bf16.mxu0 0
        %761 = vmatpush1.bf16.xpose.msra.mxu0 0
        %762 = vmatprep.subr.bf16.mxu0 0
        %763 = vmatpush1.bf16.xpose.msra.mxu0 0
        %764 = vmatprep.subr.bf16.mxu0 0
        %765 = vmatpush1.bf16.xpose.msra.mxu0 0
        %766 = vmatprep.subr.bf16.mxu0 0
        %767 = vmatpush1.bf16.xpose.msra.mxu0 0
        %768 = vmatprep.subr.bf16.mxu0 0
        %769 = vmatpush1.bf16.xpose.msra.mxu0 0
        %770 = vmatprep.subr.bf16.mxu0 0
        %771 = vmatpush1.bf16.xpose.msra.mxu0 0
        %772 = vmatprep.subr.bf16.mxu0 0
        %773 = vmatpush1.bf16.xpose.msra.mxu0 0
        %774 = vmatprep.subr.bf16.mxu0 0
        %775 = vmatpush1.bf16.xpose.msra.mxu0 %v758
        %776 = vmatprep.subr.bf16.mxu0 0
        %777 = vmatpush2.bf16.xpose.msra.mxu0 0
        %778 = vmatprep.subr.bf16.mxu0 0
        %779 = vmatpush2.bf16.xpose.msra.mxu0 0
        %780 = vmatprep.subr.bf16.mxu0 0
        %781 = vmatpush2.bf16.xpose.msra.mxu0 0
        %782 = vmatprep.subr.bf16.mxu0 0
        %783 = vmatpush2.bf16.xpose.msra.mxu0 0
        %784 = vmatprep.subr.bf16.mxu0 0
        %785 = vmatpush2.bf16.xpose.msra.mxu0 0
        %786 = vmatprep.subr.bf16.mxu0 0
        %787 = vmatpush2.bf16.xpose.msra.mxu0 0
        %788 = vmatprep.subr.bf16.mxu0 0
        %789 = vmatpush2.bf16.xpose.msra.mxu0 0
        %790 = vmatprep.subr.bf16.mxu0 0
        %791 = vmatpush2.bf16.xpose.msra.mxu0 0
        %792 = vmatprep.mubr.bf16.mxu0 0
        %793 = vmatmul.mubr.bf16.gmra.mxu0 %v755
        %v794 = vpop.f32.mrf.mxu0
        %v795 = vadd.f32 0.0, %v794
        %v796 = vpop.f32.mrf.mxu0
        %v797 = vpop.f32.mrf.mxu0
        %v798 = vadd.f32 0.0, %v797
        %v799 = vpop.f32.mrf.mxu0
        %800 = vdwg.mxu0
        %v801 = vsel %vm597, %v639, -inf
        %802 = vmax.xlane.f32.xlu0 %v801
        %v803 = vpop.xlane.xlu0 %802
        %v804 = vsel %vm597, %v642, -inf
        %805 = vmax.xlane.f32.xlu0 %v804
        %v806 = vpop.xlane.xlu0 %805
        %v807 = vsel %vm597, %v691, -inf
        %808 = vmax.xlane.f32.xlu0 %v807
        %v809 = vpop.xlane.xlu0 %808
        %v810 = vsel %vm597, %v694, -inf
        %811 = vmax.xlane.f32.xlu0 %v810
        %v812 = vpop.xlane.xlu0 %811
        %v813 = vsel %vm597, %v743, -inf
        %814 = vmax.xlane.f32.xlu0 %v813
        %v815 = vpop.xlane.xlu0 %814
        %v816 = vsel %vm597, %v746, -inf
        %817 = vmax.xlane.f32.xlu0 %v816
        %v818 = vpop.xlane.xlu0 %817
        %v819 = vsel %vm597, %v795, -inf
        %820 = vmax.xlane.f32.xlu0 %v819
        %v821 = vpop.xlane.xlu0 %820
        %v822 = vsel %vm597, %v798, -inf
        %823 = vmax.xlane.f32.xlu0 %v822
        %v824 = vpop.xlane.xlu0 %823
        %v825 = vsub.f32 %v639, %v803
        %v826 = vsub.f32 %v642, %v806
        %v827 = vsub.f32 %v691, %v809
        %v828 = vsub.f32 %v694, %v812
        %v829 = vsub.f32 %v743, %v815
        %v830 = vsub.f32 %v746, %v818
        %v831 = vsub.f32 %v795, %v821
        %v832 = vsub.f32 %v798, %v824
        %v833 = vmul.f32 %v825, 1.442695
        %v834 = vpow.pop %v833
        %v835 = vmul.f32 %v826, 1.442695
        %v836 = vpow.pop %v835
        %v837 = vmul.f32 %v827, 1.442695
        %v838 = vpow.pop %v837
        %v839 = vmul.f32 %v828, 1.442695
        %v840 = vpow.pop %v839
        %v841 = vmul.f32 %v829, 1.442695
        %v842 = vpow.pop %v841
        %v843 = vmul.f32 %v830, 1.442695
        %v844 = vpow.pop %v843
        %v845 = vmul.f32 %v831, 1.442695
        %v846 = vpow.pop %v845
        %v847 = vmul.f32 %v832, 1.442695
        %v848 = vpow.pop %v847
        %v849 = vsel %vm597, %v834, 0.0
        %850 = vadd.xlane.f32.xlu0 %v849
        %v851 = vpop.xlane.xlu0 %850
        %v852 = vsel %vm597, %v836, 0.0
        %853 = vadd.xlane.f32.xlu0 %v852
        %v854 = vpop.xlane.xlu0 %853
        %v855 = vsel %vm597, %v838, 0.0
        %856 = vadd.xlane.f32.xlu0 %v855
        %v857 = vpop.xlane.xlu0 %856
        %v858 = vsel %vm597, %v840, 0.0
        %859 = vadd.xlane.f32.xlu0 %v858
        %v860 = vpop.xlane.xlu0 %859
        %v861 = vsel %vm597, %v842, 0.0
        %862 = vadd.xlane.f32.xlu0 %v861
        %v863 = vpop.xlane.xlu0 %862
        %v864 = vsel %vm597, %v844, 0.0
        %865 = vadd.xlane.f32.xlu0 %v864
        %v866 = vpop.xlane.xlu0 %865
        %v867 = vsel %vm597, %v846, 0.0
        %868 = vadd.xlane.f32.xlu0 %v867
        %v869 = vpop.xlane.xlu0 %868
        %v870 = vsel %vm597, %v848, 0.0
        %871 = vadd.xlane.f32.xlu0 %v870
        %v872 = vpop.xlane.xlu0 %871
        %v873 = vrcp.pop %v851
        %v874 = vmul.f32 1.0, %v873
        %v875 = vrcp.pop %v854
        %v876 = vmul.f32 1.0, %v875
        %v877 = vrcp.pop %v857
        %v878 = vmul.f32 1.0, %v877
        %v879 = vrcp.pop %v860
        %v880 = vmul.f32 1.0, %v879
        %v881 = vrcp.pop %v863
        %v882 = vmul.f32 1.0, %v881
        %v883 = vrcp.pop %v866
        %v884 = vmul.f32 1.0, %v883
        %v885 = vrcp.pop %v869
        %v886 = vmul.f32 1.0, %v885
        %v887 = vrcp.pop %v872
        %v888 = vmul.f32 1.0, %v887
        %v889 = vmul.f32 %v834, %v874
        %v890 = vmul.f32 %v838, %v878
        %v891 = vmul.f32 %v842, %v882
        %v892 = vmul.f32 %v846, %v886
        %v893 = vstv %s579
        %v894 = vmul.f32 %v893, %v876
        %v895 = vmul.f32 %v893, %v880
        %v896 = vmul.f32 %v893, %v884
        %v897 = vmul.f32 %v893, %v888
        %v898 = vmul.f32 %v836, %v894
        %v899 = vmul.f32 %v840, %v895
        %v900 = vmul.f32 %v844, %v896
        %v901 = vmul.f32 %v848, %v897
        %v902 = vsub.f32 %v889, %v898
        %v903 = vsub.f32 %v890, %v899
        %v904 = vsub.f32 %v891, %v900
        %v905 = vsub.f32 %v892, %v901
        %v906 = vmul.f32 %v902, 1.442695
        %v907 = vpow.pop %v906
        %v908 = vmul.f32 %v903, 1.442695
        %v909 = vpow.pop %v908
        %v910 = vmul.f32 %v904, 1.442695
        %v911 = vpow.pop %v910
        %v912 = vmul.f32 %v905, 1.442695
        %v913 = vpow.pop %v912
        %v914 = vsel %vm597, %v907, 0.0
        %915 = vadd.xlane.f32.xlu0 %v914
        %v916 = vpop.xlane.xlu0 %915
        %v917 = vsel %vm597, %v909, 0.0
        %918 = vadd.xlane.f32.xlu0 %v917
        %v919 = vpop.xlane.xlu0 %918
        %v920 = vsel %vm597, %v911, 0.0
        %921 = vadd.xlane.f32.xlu0 %v920
        %v922 = vpop.xlane.xlu0 %921
        %v923 = vsel %vm597, %v913, 0.0
        %924 = vadd.xlane.f32.xlu0 %v923
        %v925 = vpop.xlane.xlu0 %924
        %v926 = vrcp.pop %v916
        %v927 = vmul.f32 1.0, %v926
        %v928 = vrcp.pop %v919
        %v929 = vmul.f32 1.0, %v928
        %v930 = vrcp.pop %v922
        %v931 = vmul.f32 1.0, %v930
        %v932 = vrcp.pop %v925
        %v933 = vmul.f32 1.0, %v932
        %v934 = vmul.f32 %v907, %v927
        %v935 = vmul.f32 %v909, %v929
        %v936 = vmul.f32 %v911, %v931
        %v937 = vmul.f32 %v913, %v933
        %v938 = vpack.c.bf16 %v934, %v934
        %v939 = vpack.c.bf16 %v935, %v935
        %v940 = vpack.c.bf16 %v936, %v936
        %v941 = vpack.c.bf16 %v937, %v937
        %vm942 = vcmask 60416
        %943 = vst.msk [vmem:[%s513] sm:$0xf] %vm942, %v938
        %944 = vst.msk [vmem:[%s513 + $0x4] sm:$0xf] %vm942, %v939
        %945 = vst.msk [vmem:[%s513 + $0x8] sm:$0xf] %vm942, %v940
        %946 = vst.msk [vmem:[%s513 + $0xc] sm:$0xf] %vm942, %v941
        %v947 = vld [vmem:[%s561] sm:$0xff]
        %v948 = vld [vmem:[%s561 + $0x8] sm:$0xff]
        %v949 = vld [vmem:[%s561 + $0x10] sm:$0xff]
        %v950 = vld [vmem:[%s561 + $0x18] sm:$0xff]
        %v951 = vmul.f32 %v947, 5.0
        %v952 = vmul.f32 %v948, 5.0
        %v953 = vmul.f32 %v949, 5.0
        %v954 = vmul.f32 %v950, 5.0
        %v955 = vxor.u32 %v951, 2147483648
        %v956 = vxor.u32 %v952, 2147483648
        %v957 = vxor.u32 %v953, 2147483648
        %v958 = vxor.u32 %v954, 2147483648
        %v959 = vmul.f32 %v955, 1.442695
        %v960 = vpow.pop %v959
        %v961 = vmul.f32 %v956, 1.442695
        %v962 = vpow.pop %v961
        %v963 = vmul.f32 %v957, 1.442695
        %v964 = vpow.pop %v963
        %v965 = vmul.f32 %v958, 1.442695
        %v966 = vpow.pop %v965
        %v967 = vadd.f32 %v960, 1.0
        %v968 = vadd.f32 %v962, 1.0
        %v969 = vadd.f32 %v964, 1.0
        %v970 = vadd.f32 %v966, 1.0
        %v971 = vrcp.pop %v967
        %v972 = vmul.f32 1.0, %v971
        %v973 = vrcp.pop %v968
        %v974 = vmul.f32 1.0, %v973
        %v975 = vrcp.pop %v969
        %v976 = vmul.f32 1.0, %v975
        %v977 = vrcp.pop %v970
        %v978 = vmul.f32 1.0, %v977
        %v979 = vadd.f32 %v972, 1e-05
        %v980 = vadd.f32 %v974, 1e-05
        %v981 = vadd.f32 %v976, 1e-05
        %v982 = vadd.f32 %v978, 1e-05
        %v983 = vpow.f32 3.0, %v979
        %v984 = vpow.f32 3.0, %v980
        %v985 = vpow.f32 3.0, %v981
        %v986 = vpow.f32 3.0, %v982
        %v987 = vsub.f32 %v983, 1.0
        %v988 = vsub.f32 %v984, 1.0
        %v989 = vsub.f32 %v985, 1.0
        %v990 = vsub.f32 %v986, 1.0
        %vm991 = vcmask 7168
        %992 = vst.msk [vmem:[%s576] sm:$0xff] %vm991, %v987
        %993 = vst.msk [vmem:[%s576 + $0x8] sm:$0xff] %vm991, %v988
        %994 = vst.msk [vmem:[%s576 + $0x10] sm:$0xff] %vm991, %v989
        %995 = vst.msk [vmem:[%s576 + $0x18] sm:$0xff] %vm991, %v990
        %v996 = vlaneseq
        %v997 = vshrl.u32 %v996, 7
        %s998 = smul.u32 %s41, 8
        %v999 = vstv %s998
        %v1000 = vadd.s32 %v997, %v999
        %v1001 = vlaneseq
        %v1002 = vand.u32 %v1001, 127
        %v1003 = vsub.s32 %v1000, %v1002
        %vm1004 = vcmp.lt.s32.totalorder %v1003, 0
        %v1005 = vsub.s32 0, %v1003
        %v1006 = vsel %vm1004, %v1005, %v1003
        %v1007 = vcvt.s32.f32 %v1006
        %v1008 = vmul.f32 %v1007, %v1007
        %v1009 = vmul.f32 %v1008, -0.5
        %v1010 = vrcp.pop %v987
        %v1011 = vmul.f32 1.0, %v1010
        %v1012 = vrcp.pop %v988
        %v1013 = vmul.f32 1.0, %v1012
        %v1014 = vrcp.pop %v989
        %v1015 = vmul.f32 1.0, %v1014
        %v1016 = vrcp.pop %v990
        %v1017 = vmul.f32 1.0, %v1016
        %v1018 = vmul.f32 %v1011, 0.3989423
        %v1019 = vmul.f32 %v1013, 0.3989423
        %v1020 = vmul.f32 %v1015, 0.3989423
        %v1021 = vmul.f32 %v1017, 0.3989423
        %v1022 = vmul.f32 %v1011, %v1011
        %v1023 = vmul.f32 %v1013, %v1013
        %v1024 = vmul.f32 %v1015, %v1015
        %v1025 = vmul.f32 %v1017, %v1017
        %1027 = vset.pattern.permute.xlu0 0
        %1028 = vperm.xlu0 %1027, %v1022
        %v1029 = vpop.permute.xlu0 %1028
        %1032 = vset.pattern.permute.xlu0 0
        %1033 = vperm.xlu0 %1032, %v1023
        %v1034 = vpop.permute.xlu0 %1033
        %1037 = vset.pattern.permute.xlu0 0
        %1038 = vperm.xlu0 %1037, %v1024
        %v1039 = vpop.permute.xlu0 %1038
        %1042 = vset.pattern.permute.xlu0 0
        %1043 = vperm.xlu0 %1042, %v1025
        %v1044 = vpop.permute.xlu0 %1043
        %v1046 = vmul.f32 %v1009, %v1029
        %v1047 = vmul.f32 %v1009, %v1034
        %v1048 = vmul.f32 %v1009, %v1039
        %v1049 = vmul.f32 %v1009, %v1044
        %v1050 = vmul.f32 %v1046, 1.442695
        %v1051 = vpow.pop %v1050
        %v1052 = vmul.f32 %v1047, 1.442695
        %v1053 = vpow.pop %v1052
        %v1054 = vmul.f32 %v1048, 1.442695
        %v1055 = vpow.pop %v1054
        %v1056 = vmul.f32 %v1049, 1.442695
        %v1057 = vpow.pop %v1056
        %1059 = vset.pattern.permute.xlu0 0
        %1060 = vperm.xlu0 %1059, %v1018
        %v1061 = vpop.permute.xlu0 %1060
        %1064 = vset.pattern.permute.xlu0 0
        %1065 = vperm.xlu0 %1064, %v1019
        %v1066 = vpop.permute.xlu0 %1065
        %1069 = vset.pattern.permute.xlu0 0
        %1070 = vperm.xlu0 %1069, %v1020
        %v1071 = vpop.permute.xlu0 %1070
        %1074 = vset.pattern.permute.xlu0 0
        %1075 = vperm.xlu0 %1074, %v1021
        %v1076 = vpop.permute.xlu0 %1075
        %v1078 = vmul.f32 %v1061, %v1051
        %v1079 = vmul.f32 %v1066, %v1053
        %v1080 = vmul.f32 %v1071, %v1055
        %v1081 = vmul.f32 %v1076, %v1057
        %v1082 = vpack.c.bf16 %v1078, %v1078
        %v1083 = vpack.c.bf16 %v1079, %v1079
        %v1084 = vpack.c.bf16 %v1080, %v1080
        %v1085 = vpack.c.bf16 %v1081, %v1081
        %1086 = vst.msk [vmem:[%s520] sm:$0xf] %vm942, %v1082
        %1087 = vst.msk [vmem:[%s520 + $0x4] sm:$0xf] %vm942, %v1083
        %1088 = vst.msk [vmem:[%s520 + $0x8] sm:$0xf] %vm942, %v1084
        %1089 = vst.msk [vmem:[%s520 + $0xc] sm:$0xf] %vm942, %v1085
        %v1090 = vld [vmem:[%s449] sm:$0xf]
        %v1091 = vld [vmem:[%s449 + $0x4] sm:$0xf]
        %v1092 = vpack.c.bf16 %v903, %v902
        %v1093 = vpack.c.bf16 %v905, %v904
        %v1095 = vsel %vm597, %v1092, 0
        %vm1097 = vcmask 1043456
        %v1099 = vsel %vm1097, %v1090, 0
        %1101 = vmatprep.subr.bf16.mxu0 0
        %1102 = vmatpush1.bf16.msra.mxu0 0
        %1103 = vmatprep.subr.bf16.mxu0 0
        %1104 = vmatpush1.bf16.msra.mxu0 0
        %1105 = vmatprep.subr.bf16.mxu0 0
        %1106 = vmatpush1.bf16.msra.mxu0 0
        %1107 = vmatprep.subr.bf16.mxu0 0
        %1108 = vmatpush1.bf16.msra.mxu0 0
        %1109 = vmatprep.subr.bf16.mxu0 0
        %1110 = vmatpush1.bf16.msra.mxu0 0
        %1111 = vmatprep.subr.bf16.mxu0 0
        %1112 = vmatpush1.bf16.msra.mxu0 0
        %1113 = vmatprep.subr.bf16.mxu0 0
        %1114 = vmatpush1.bf16.msra.mxu0 0
        %1115 = vmatprep.subr.bf16.mxu0 0
        %1116 = vmatpush1.bf16.msra.mxu0 %v1099
        %1117 = vmatprep.subr.bf16.mxu0 0
        %1118 = vmatpush2.bf16.msra.mxu0 0
        %1119 = vmatprep.subr.bf16.mxu0 0
        %1120 = vmatpush2.bf16.msra.mxu0 0
        %1121 = vmatprep.subr.bf16.mxu0 0
        %1122 = vmatpush2.bf16.msra.mxu0 0
        %1123 = vmatprep.subr.bf16.mxu0 0
        %1124 = vmatpush2.bf16.msra.mxu0 0
        %1125 = vmatprep.subr.bf16.mxu0 0
        %1126 = vmatpush2.bf16.msra.mxu0 0
        %1127 = vmatprep.subr.bf16.mxu0 0
        %1128 = vmatpush2.bf16.msra.mxu0 0
        %1129 = vmatprep.subr.bf16.mxu0 0
        %1130 = vmatpush2.bf16.msra.mxu0 0
        %1131 = vmatprep.subr.bf16.mxu0 0
        %1132 = vmatpush2.bf16.msra.mxu0 0
        %1133 = vmatprep.mubr.bf16.mxu0 0
        %1134 = vmatmul.mubr.bf16.gmra.mxu0 %v1095
        %v1135 = vpop.f32.mrf.mxu0
        %v1136 = vadd.f32 0.0, %v1135
        %v1137 = vpop.f32.mrf.mxu0
        %v1138 = vpop.f32.mrf.mxu0
        %v1139 = vadd.f32 0.0, %v1138
        %v1140 = vpop.f32.mrf.mxu0
        %1141 = vdwg.mxu0
        %v1143 = vsel %vm597, %v1093, 0
        %v1146 = vsel %vm1097, %v1091, 0
        %1148 = vmatprep.subr.bf16.mxu0 0
        %1149 = vmatpush1.bf16.msra.mxu0 0
        %1150 = vmatprep.subr.bf16.mxu0 0
        %1151 = vmatpush1.bf16.msra.mxu0 0
        %1152 = vmatprep.subr.bf16.mxu0 0
        %1153 = vmatpush1.bf16.msra.mxu0 0
        %1154 = vmatprep.subr.bf16.mxu0 0
        %1155 = vmatpush1.bf16.msra.mxu0 0
        %1156 = vmatprep.subr.bf16.mxu0 0
        %1157 = vmatpush1.bf16.msra.mxu0 0
        %1158 = vmatprep.subr.bf16.mxu0 0
        %1159 = vmatpush1.bf16.msra.mxu0 0
        %1160 = vmatprep.subr.bf16.mxu0 0
        %1161 = vmatpush1.bf16.msra.mxu0 0
        %1162 = vmatprep.subr.bf16.mxu0 0
        %1163 = vmatpush1.bf16.msra.mxu0 %v1146
        %1164 = vmatprep.subr.bf16.mxu0 0
        %1165 = vmatpush2.bf16.msra.mxu0 0
        %1166 = vmatprep.subr.bf16.mxu0 0
        %1167 = vmatpush2.bf16.msra.mxu0 0
        %1168 = vmatprep.subr.bf16.mxu0 0
        %1169 = vmatpush2.bf16.msra.mxu0 0
        %1170 = vmatprep.subr.bf16.mxu0 0
        %1171 = vmatpush2.bf16.msra.mxu0 0
        %1172 = vmatprep.subr.bf16.mxu0 0
        %1173 = vmatpush2.bf16.msra.mxu0 0
        %1174 = vmatprep.subr.bf16.mxu0 0
        %1175 = vmatpush2.bf16.msra.mxu0 0
        %1176 = vmatprep.subr.bf16.mxu0 0
        %1177 = vmatpush2.bf16.msra.mxu0 0
        %1178 = vmatprep.subr.bf16.mxu0 0
        %1179 = vmatpush2.bf16.msra.mxu0 0
        %1180 = vmatprep.mubr.bf16.mxu0 0
        %1181 = vmatmul.mubr.bf16.gmra.mxu0 %v1143
        %v1182 = vpop.f32.mrf.mxu0
        %v1183 = vadd.f32 0.0, %v1182
        %v1184 = vpop.f32.mrf.mxu0
        %v1185 = vpop.f32.mrf.mxu0
        %v1186 = vadd.f32 0.0, %v1185
        %v1187 = vpop.f32.mrf.mxu0
        %1188 = vdwg.mxu0
        %v1189 = vmul.f32 %v1136, %v1136
        %v1190 = vmul.f32 %v1139, %v1139
        %v1191 = vmul.f32 %v1183, %v1183
        %v1192 = vmul.f32 %v1186, %v1186
        %vm1193 = vcmask 130048
        %v1194 = vsel %vm1193, %v1189, 0.0
        %1195 = vadd.xlane.f32.xlu0 %v1194
        %v1196 = vpop.xlane.xlu0 %1195
        %v1197 = vsel %vm1193, %v1190, 0.0
        %1198 = vadd.xlane.f32.xlu0 %v1197
        %v1199 = vpop.xlane.xlu0 %1198
        %v1200 = vsel %vm1193, %v1191, 0.0
        %1201 = vadd.xlane.f32.xlu0 %v1200
        %v1202 = vpop.xlane.xlu0 %1201
        %v1203 = vsel %vm1193, %v1192, 0.0
        %1204 = vadd.xlane.f32.xlu0 %v1203
        %v1205 = vpop.xlane.xlu0 %1204
        %v1206 = vrcp.pop 16.0
        %v1207 = vmul.f32 %v1196, %v1206
        %v1208 = vmul.f32 %v1199, %v1206
        %v1209 = vmul.f32 %v1202, %v1206
        %v1210 = vmul.f32 %v1205, %v1206
        %v1211 = vadd.f32 %v1207, 1e-05
        %v1212 = vadd.f32 %v1208, 1e-05
        %v1213 = vadd.f32 %v1209, 1e-05
        %v1214 = vadd.f32 %v1210, 1e-05
        %v1215 = vrsqrt.pop %v1211
        %v1216 = vrsqrt.pop %v1212
        %v1217 = vrsqrt.pop %v1213
        %v1218 = vrsqrt.pop %v1214
        %v1219 = vmul.f32 %v1136, %v1215
        %v1220 = vmul.f32 %v1139, %v1216
        %v1221 = vmul.f32 %v1183, %v1217
        %v1222 = vmul.f32 %v1186, %v1218
        %v1223 = vld [vmem:[%s5] sm:$0x1]
        %v1225 = vlaneseq
        %v1226 = vshrl.u32 %v1225, 7
        %v1227 = vsub.s32 0, %v1226
        %v1228 = vrot.slane %v1223, %v1227
        %v1230 = vmul.f32 %v1219, %v1228
        %v1231 = vmul.f32 %v1220, %v1228
        %v1232 = vmul.f32 %v1221, %v1228
        %v1233 = vmul.f32 %v1222, %v1228
        %v1234 = vmul.f32 %v1230, 0.64449096
        %v1235 = vmul.f32 %v1231, 0.64449096
        %v1236 = vmul.f32 %v1232, 0.64449096
        %v1237 = vmul.f32 %v1233, 0.64449096
        %1239 = vrot.lane.b32.xlu0 %v1235, 16
        %v1240 = vpop.permute.xlu0 %1239
        %1243 = vrot.lane.b32.xlu0 %v1236, 32
        %v1244 = vpop.permute.xlu0 %1243
        %1247 = vrot.lane.b32.xlu0 %v1237, 48
        %v1248 = vpop.permute.xlu0 %1247
        %v1250 = vsel %vm1193, %v1234, %v1240
        %vm1251 = vcmask 261120
        %v1252 = vsel %vm1251, %v1250, %v1244
        %vm1253 = vcmask 392192
        %v1254 = vsel %vm1253, %v1252, %v1248
        %vm1255 = vcmask 523264
        %1256 = vst.msk [vmem:[%s506] sm:$0xff] %vm1255, %v1254
        %s1257 = sand.u32 %s223, 1
        %s1258 = scalar_lea.sflag [#allocation5], %s1257
        %s1259 = sand.u32 %s223, 1
        %s1260 = smul.addr %s1259, 8
        %s1261 = scalar_lea.vmem [#allocation8], %s1260
        %s1262 = sand.u32 %s34, 1
        %s1263 = scalar_lea.sflag [#allocation10], %s1262
        %s1264 = sand.u32 %s253, 1
        %s1265 = smul.addr %s1264, 16
        %s1266 = scalar_lea.vmem [#allocation9], %s1265
        %s1267 = sand.u32 %s34, 1
        %s1268 = scalar_lea.sflag [#allocation10], %s1267
        %s1269 = sand.u32 %s283, 1
        %s1270 = smul.addr %s1269, 16
        %s1271 = scalar_lea.vmem [#allocation11], %s1270
        %s1272 = smul.u32 4, %s40
        %p1273 = scmp.lt.s32.totalorder %s39, 1
        %s1274 = scalar_select %p1273, %s39, 1
        %p1275 = scmp.lt.s32.totalorder %s1272, 3
        %s1276 = scalar_select %p1275, %s1272, 3
        %p1277 = scmp.lt.s32.totalorder %s41, 0
        %s1278 = scalar_select %p1277, %s41, 0
        %s1279 = sadd.s32 %s1278, %s1276
        %s1280 = smul.addr %s1274, 4
        %s1281 = sadd.s32 %s1279, %s1280
        %s1282 = smul.addr %s1281, 8
        %s1283 = scalar_lea.vmem %s9, %s1282
        // Predicated region
        $region53: #{tpu_custom_call.1} parent=43 // pred_check
          %p1284 = pneg %p233
        $region54: #{tpu_custom_call.1} parent=43 // pred_check_branch
          %1286 = sbr.rel (%p1284) target = $region56
        $region55: #{tpu_custom_call.1} parent=43 // pred_region
          %s1288 = ssub.s32 128, 128
          %1289 = vsyncadd %s1258, %s1288
          %s1290 = sadd.s32 %s40, %s41
          %s1291 = sadd.s32 %s1290, %s39
          %s1292 = smul.addr %s1291, 128
          %s1293 = scalar_lea.hbm %s6, %s1292
          %s1295 = sshll.u32 %s1261, 4
          %s1296 = int_to_ptr.vmem [resolvable:$true] %s1295
          %1298 = dma.vmem_to_hbm [thread:$0]  %s1296, 128, %s1293, %s1258
        $region56: #{tpu_custom_call.1} parent=43 // pred_fallthru
          _
        // Predicated region
        $region57: #{tpu_custom_call.1} parent=43 // pred_check
          %p1299 = pneg %p263
        $region58: #{tpu_custom_call.1} parent=43 // pred_check_branch
          %1301 = sbr.rel (%p1299) target = $region60
        $region59: #{tpu_custom_call.1} parent=43 // pred_region
          %s1302 = smul.u32 4, %s40
          %s1304 = ssub.s32 256, 256
          %1305 = vsyncadd %s1263, %s1304
          %s1306 = sadd.s32 %s41, %s1302
          %s1307 = smul.addr %s39, 4
          %s1308 = sadd.s32 %s1306, %s1307
          %s1309 = smul.addr %s1308, 64
          %s1310 = scalar_lea.hbm %s7, %s1309
          %s1311 = sshll.u32 %s1266, 4
          %s1312 = int_to_ptr.vmem [resolvable:$true] %s1311
          %1317 = dma.vmem_to_hbm [thread:$0]  %s1312, 256, %s1310, %s1263, 64, 64, 4
        $region60: #{tpu_custom_call.1} parent=43 // pred_fallthru
          _
        // Predicated region
        $region61: #{tpu_custom_call.1} parent=43 // pred_check
          %p1318 = pneg %p293
        $region62: #{tpu_custom_call.1} parent=43 // pred_check_branch
          %1320 = sbr.rel (%p1318) target = $region64
        $region63: #{tpu_custom_call.1} parent=43 // pred_region
          %s1321 = smul.u32 4, %s40
          %s1323 = ssub.s32 256, 256
          %1324 = vsyncadd %s1268, %s1323
          %s1325 = sadd.s32 %s41, %s1321
          %s1326 = smul.addr %s39, 4
          %s1327 = sadd.s32 %s1325, %s1326
          %s1328 = smul.addr %s1327, 64
          %s1329 = scalar_lea.hbm %s8, %s1328
          %s1330 = sshll.u32 %s1271, 4
          %s1331 = int_to_ptr.vmem [resolvable:$true] %s1330
          %1336 = dma.vmem_to_hbm [thread:$0]  %s1331, 256, %s1329, %s1268, 64, 64, 4
        $region64: #{tpu_custom_call.1} parent=43 // pred_fallthru
          _
        // Predicated region
        $region65: #{tpu_custom_call.1} parent=43 // pred_check
          %p1337 = pneg %p323
        $region66: #{tpu_custom_call.1} parent=43 // pred_check_branch
          %1339 = sbr.rel (%p1337) target = $region68
        $region67: #{tpu_custom_call.1} parent=43 // pred_region
          %s1340 = smul.u32 4, %s40
        $region68: #{tpu_custom_call.1} parent=43 // pred_fallthru
          _
      $region44: #{tpu_custom_call.1} parent=5 // pred_fallthru
        _
      %p1341 = scmp.le.s32.totalorder 2, %s29
      // Predicated region
      $region69: #{tpu_custom_call.1} parent=5 // pred_check
        %p1342 = pneg %p1341
      $region70: #{tpu_custom_call.1} parent=5 // pred_check_branch
        %1344 = sbr.rel (%p1342) target = $region72
      $region71: #{tpu_custom_call.1} parent=5 // pred_region
        %s1345 = ssub.s32 %s29, 2
        // Predicated region
        $region73: #{tpu_custom_call.1} parent=71 // pred_check
          %p1346 = pneg %p239
        $region74: #{tpu_custom_call.1} parent=71 // pred_check_branch
          %1348 = sbr.rel (%p1346) target = $region76
        $region75: #{tpu_custom_call.1} parent=71 // pred_region
          %s1349 = sand.u32 %s224, 1
          %s1350 = scalar_lea.sflag [#allocation5], %s1349
          %s1351 = sand.u32 %s224, 1
          %s1352 = smul.addr %s1351, 8
          %s1353 = scalar_lea.vmem [#allocation8], %s1352
          %1354 = dma.done %s1350, 128
        $region76: #{tpu_custom_call.1} parent=71 // pred_fallthru
          _
        // Predicated region
        $region77: #{tpu_custom_call.1} parent=71 // pred_check
          %p1355 = pneg %p269
        $region78: #{tpu_custom_call.1} parent=71 // pred_check_branch
          %1357 = sbr.rel (%p1355) target = $region80
        $region79: #{tpu_custom_call.1} parent=71 // pred_region
          %s1358 = sand.u32 %s35, 1
          %s1359 = scalar_lea.sflag [#allocation10], %s1358
          %s1360 = sand.u32 %s254, 1
          %s1361 = smul.addr %s1360, 16
          %s1362 = scalar_lea.vmem [#allocation9], %s1361
          %1363 = dma.done %s1359, 256
        $region80: #{tpu_custom_call.1} parent=71 // pred_fallthru
          _
        // Predicated region
        $region81: #{tpu_custom_call.1} parent=71 // pred_check
          %p1364 = pneg %p299
        $region82: #{tpu_custom_call.1} parent=71 // pred_check_branch
          %1366 = sbr.rel (%p1364) target = $region84
        $region83: #{tpu_custom_call.1} parent=71 // pred_region
          %s1367 = sand.u32 %s35, 1
          %s1368 = scalar_lea.sflag [#allocation10], %s1367
          %s1369 = sand.u32 %s284, 1
          %s1370 = smul.addr %s1369, 16
          %s1371 = scalar_lea.vmem [#allocation11], %s1370
          %1372 = dma.done %s1368, 256
        $region84: #{tpu_custom_call.1} parent=71 // pred_fallthru
          _
        // Predicated region
        $region85: #{tpu_custom_call.1} parent=71 // pred_check
          %p1373 = pneg %p329
        $region86: #{tpu_custom_call.1} parent=71 // pred_check_branch
          %1375 = sbr.rel (%p1373) target = $region88
        $region87: #{tpu_custom_call.1} parent=71 // pred_region
          %s1376 = smul.u32 4, %s43
          %p1377 = scmp.lt.s32.totalorder %s42, 1
          %s1378 = scalar_select %p1377, %s42, 1
          %p1379 = scmp.lt.s32.totalorder %s1376, 3
          %s1380 = scalar_select %p1379, %s1376, 3
          %p1381 = scmp.lt.s32.totalorder %s44, 0
          %s1382 = scalar_select %p1381, %s44, 0
          %s1383 = sadd.s32 %s1382, %s1380
          %s1384 = smul.addr %s1378, 4
          %s1385 = sadd.s32 %s1383, %s1384
          %s1386 = smul.addr %s1385, 8
          %s1387 = scalar_lea.vmem %s9, %s1386
        $region88: #{tpu_custom_call.1} parent=71 // pred_fallthru
          _
      $region72: #{tpu_custom_call.1} parent=5 // pred_fallthru
        _
    $region6: #{tpu_custom_call.1} parent=1 // loop_footer
      %s33 = sadd.s32 1, %s29
    $region7: #{tpu_custom_call.1} parent=1 // loop_footer_branch
      %28 = sbr.rel target = $region3
    $region8: #{tpu_custom_call.1} parent=1 // loop_exit
      _
    %1388 = vsyncpa [#allocation4], 1
    %s1389 = scalar_lea.sflag [#allocation4], 1
    %1390 = vsyncpa %s1389, 1
    %1391 = vsyncpa [#allocation7], 1
    %s1392 = scalar_lea.sflag [#allocation7], 1
    %1393 = vsyncpa %s1392, 1
    %1394 = vsyncpa [#allocation5], 1
    %s1395 = scalar_lea.sflag [#allocation5], 1
    %1396 = vsyncpa %s1395, 1
    %1397 = vsyncpa [#allocation10], 1
    %s1398 = scalar_lea.sflag [#allocation10], 1
    %1399 = vsyncpa %s1398, 1

</llo_original>
